<compile_context>
chip_gen: v7x
topology: tpu7x:2x2x1
jax: 0.10.0
libtpu: 0.0.40
codegen_flags: <defaults>
</compile_context>

<pallas_src>
import functools

import numpy as np

import jax
import jax.numpy as jnp
from jax import lax
from jax.experimental import pallas as pl
from jax.experimental.pallas import tpu as pltpu


# ---------------------------------------------------------------------------
# Kernel 1: continuous position bias MLP (parameter-only, runs once).
# ---------------------------------------------------------------------------
def _cpb_mlp_kernel(ch_ref, cw_ref, w1h_ref, w1w_ref, b1_ref, w2_ref, o_ref):
    # First linear has K=2, so expand it as two broadcast multiply-adds on the
    # VPU instead of a degenerate MXU matmul.
    hidden = ch_ref[...] * w1h_ref[...] + cw_ref[...] * w1w_ref[...] + b1_ref[...]
    hidden = jnp.maximum(hidden, 0.0)                                   # ReLU
    o_ref[...] = jnp.dot(hidden, w2_ref[...],
                         preferred_element_type=jnp.float32).astype(o_ref.dtype)


def _cpb_bias_table(table, cpb_w1, cpb_b1, cpb_w2):
    """table: (T, 2); cpb_w1: (512, 2); cpb_b1: (512,); cpb_w2: (nH, 512)."""
    T = table.shape[0]
    nH = cpb_w2.shape[0]
    ch = table[:, 0:1].astype(jnp.float32)           # (T, 1)
    cw = table[:, 1:2].astype(jnp.float32)           # (T, 1)
    w1h = cpb_w1[:, 0].reshape(1, -1).astype(jnp.float32)  # (1, 512)
    w1w = cpb_w1[:, 1].reshape(1, -1).astype(jnp.float32)  # (1, 512)
    b1 = cpb_b1.reshape(1, -1).astype(jnp.float32)          # (1, 512)
    w2t = cpb_w2.T.astype(jnp.float32)                      # (512, nH)
    return pl.pallas_call(
        _cpb_mlp_kernel,
        out_shape=jax.ShapeDtypeStruct((T, nH), jnp.float32),
    )(ch, cw, w1h, w1w, b1, w2t)


# ---------------------------------------------------------------------------
# Kernel 2: fused window attention, one (window-block, head) pair per step.
# ---------------------------------------------------------------------------
def _window_attention_kernel(has_mask, *refs):
    if has_mask:
        (x_ref, wq_ref, wk_ref, wv_ref, bq_ref, bv_ref, scale_ref,
         bias_ref, mask_ref, wproj_ref, bproj_ref, o_ref, acc_ref) = refs
    else:
        (x_ref, wq_ref, wk_ref, wv_ref, bq_ref, bv_ref, scale_ref,
         bias_ref, wproj_ref, bproj_ref, o_ref, acc_ref) = refs
        mask_ref = None

    h = pl.program_id(1)

    @pl.when(h == 0)
    def _init():
        acc_ref[...] = jnp.zeros_like(acc_ref)

    WB, N, C = x_ref.shape
    hd = wq_ref.shape[-1]

    # Merge the window block into the row (sublane) axis for tall MXU matmuls.
    x = x_ref[...].reshape(WB * N, C)                                  # (WB*N, C)

    # Per-head qkv projection (MXU, f32 accumulation; k has no bias).
    q = jnp.dot(x, wq_ref[0], preferred_element_type=jnp.float32) + bq_ref[0]
    k = jnp.dot(x, wk_ref[0], preferred_element_type=jnp.float32)
    v = jnp.dot(x, wv_ref[0], preferred_element_type=jnp.float32) + bv_ref[0]

    # Swin-V2 cosine attention: L2-normalize q and k rows (F.normalize eps=1e-12)
    # via EUP rsqrt (cheap, off the VALU path).
    qn = q * lax.rsqrt(jnp.maximum(jnp.sum(q * q, axis=-1, keepdims=True), 1e-24))
    kn = k * lax.rsqrt(jnp.maximum(jnp.sum(k * k, axis=-1, keepdims=True), 1e-24))

    # Fold the per-head logit scale into qn ((WB*N, hd) is smaller than (WB,N,N)).
    qn = qn * scale_ref[0]

    qn = qn.reshape(WB, N, hd)
    kn = kn.reshape(WB, N, hd)
    vb = v.reshape(WB, N, hd)

    # Batched q @ k^T over the window block (contract head dim, batch windows).
    attn = jnp.einsum('bqd,bkd->bqk', qn, kn,
                      preferred_element_type=jnp.float32)              # (WB, N, N)
    attn = attn + bias_ref[...]                                        # (1,N,N) bcast
    if mask_ref is not None:
        attn = attn + mask_ref[...]                                    # (WB,N,N)

    # Softmax over keys (exp on EUP; approx reciprocal also on EUP).
    attn = attn - jnp.max(attn, axis=-1, keepdims=True)
    p = jnp.exp(attn)
    p = p * pl.reciprocal(jnp.sum(p, axis=-1, keepdims=True), approx=True)

    ctx = jnp.einsum('bqk,bkd->bqd', p, vb,
                     preferred_element_type=jnp.float32)               # (WB, N, hd)

    # Accumulate this head's slice of the output projection (avoids the
    # explicit per-head concat and an extra HBM round trip).
    acc_ref[...] += jnp.dot(ctx.reshape(WB * N, hd), wproj_ref[0],
                            preferred_element_type=jnp.float32).reshape(WB, N, C)

    @pl.when(h == pl.num_programs(1) - 1)
    def _finish():
        o_ref[...] = (acc_ref[...] + bproj_ref[...]).astype(o_ref.dtype)


# ---------------------------------------------------------------------------
# Host-side helpers (buffer construction, identical to the PyTorch __init__).
# ---------------------------------------------------------------------------
def _relative_tables(window_size, pretrained_window_size=(0, 0)):
    Wh, Ww = window_size
    rh = np.arange(-(Wh - 1), Wh, dtype=np.float32)
    rw = np.arange(-(Ww - 1), Ww, dtype=np.float32)
    table = np.stack(np.meshgrid(rh, rw, indexing="ij"), axis=-1)  # (2Wh-1, 2Ww-1, 2)
    if pretrained_window_size[0] > 0:
        table[..., 0] /= pretrained_window_size[0] - 1
        table[..., 1] /= pretrained_window_size[1] - 1
    else:
        table[..., 0] /= Wh - 1
        table[..., 1] /= Ww - 1
    table *= 8.0
    table = np.sign(table) * np.log2(np.abs(table) + 1.0) / np.log2(8.0)
    table = table.reshape(-1, 2).astype(np.float32)                # (T, 2)

    coords = np.stack(np.meshgrid(np.arange(Wh), np.arange(Ww), indexing="ij"))
    coords = coords.reshape(2, -1)
    rel = coords[:, :, None] - coords[:, None, :]                  # (2, N, N)
    rel = rel.transpose(1, 2, 0).astype(np.int64)                  # (N, N, 2)
    rel[..., 0] += Wh - 1
    rel[..., 1] += Ww - 1
    rel[..., 0] *= 2 * Ww - 1
    rpi = rel.sum(-1).astype(np.int32)                             # (N, N)
    return table, rpi


def _largest_divisor_leq(n, cap):
    cap = int(max(1, min(n, cap)))
    for d in range(cap, 0, -1):
        if n % d == 0:
            return d
    return 1


def window_attention_forward(x, qkv_weight, q_bias, v_bias, logit_scale,
                             cpb_w1, cpb_b1, cpb_w2, proj_weight, proj_bias,
                             window_size, num_heads,
                             mask=None, v_length=None,
                             pretrained_window_size=(0, 0)):
    """x: (num_windows*B, N, C) with N = Wh*Ww.  Returns (num_windows*B, N, C)."""
    B_, N, C = x.shape
    Wh, Ww = window_size
    assert N == Wh * Ww, "input feature has wrong size"
    nH = num_heads
    assert C % nH == 0
    hd = C // nH

    # ---- parameter-only work (done once, outside the hot loop) -------------
    table_np, rpi_np = _relative_tables(window_size, pretrained_window_size)
    bias_table = _cpb_bias_table(jnp.asarray(table_np), cpb_w1, cpb_b1, cpb_w2)  # (T, nH)
    rpi = jnp.asarray(rpi_np.reshape(-1))
    rpb = jnp.take(bias_table, rpi, axis=0).reshape(N, N, nH)
    rpb = jnp.transpose(rpb, (2, 0, 1))                    # (nH, N, N)
    rpb = 16.0 * jax.nn.sigmoid(rpb)
    if v_length is not None and v_length < N:
        # The bias only touches attn[..., :v_length, :v_length]; realize that
        # by zero-padding the bias outside that square.
        keep1d = jnp.arange(N) < v_length
        keep = keep1d[:, None] & keep1d[None, :]
        rpb = jnp.where(keep[None], rpb, 0.0)
    rpb = rpb.astype(jnp.float32)

    scale = jnp.exp(jnp.minimum(logit_scale, jnp.log(1.0 / 0.01)))
    scale = scale.reshape(nH, 1, 1).astype(jnp.float32)

    # Per-head weight slabs (head slicing done here, never inside the kernel).
    wqkv_t = qkv_weight.T                                  # (C, 3C), x @ W form
    wq = wqkv_t[:, 0 * C:1 * C].reshape(C, nH, hd).transpose(1, 0, 2)  # (nH, C, hd)
    wk = wqkv_t[:, 1 * C:2 * C].reshape(C, nH, hd).transpose(1, 0, 2)
    wv = wqkv_t[:, 2 * C:3 * C].reshape(C, nH, hd).transpose(1, 0, 2)
    bq = q_bias.reshape(nH, 1, hd)
    bv = v_bias.reshape(nH, 1, hd)
    wproj = proj_weight.T.reshape(nH, hd, C)               # per-head rows of proj
    bproj = proj_bias.reshape(1, C)

    has_mask = mask is not None

    # Windows per grid step: aim for ~512 token rows per block.  With a mask,
    # WB must divide nW so a block of consecutive windows maps onto one
    # aligned block of the (nW, N, N) mask array.
    target = max(1, 512 // max(N, 1))
    if has_mask:
        nW = mask.shape[0]
        assert B_ % nW == 0, "B_ must be a multiple of the number of masks"
        WB = _largest_divisor_leq(nW, target)
        mask_blocks = nW // WB
        mask_arr = mask.astype(jnp.float32)
    else:
        WB = _largest_divisor_leq(B_, target)
    nblk = B_ // WB

    in_specs = [
        pl.BlockSpec((WB, N, C), lambda b, h: (b, 0, 0)),       # x
        pl.BlockSpec((1, C, hd), lambda b, h: (h, 0, 0)),       # wq
        pl.BlockSpec((1, C, hd), lambda b, h: (h, 0, 0)),       # wk
        pl.BlockSpec((1, C, hd), lambda b, h: (h, 0, 0)),       # wv
        pl.BlockSpec((1, 1, hd), lambda b, h: (h, 0, 0)),       # bq
        pl.BlockSpec((1, 1, hd), lambda b, h: (h, 0, 0)),       # bv
        pl.BlockSpec((1, 1, 1), lambda b, h: (h, 0, 0)),        # scale
        pl.BlockSpec((1, N, N), lambda b, h: (h, 0, 0)),        # rel-pos bias
    ]
    inputs = [x, wq, wk, wv, bq, bv, scale, rpb]
    if has_mask:
        in_specs.append(
            pl.BlockSpec((WB, N, N),
                         lambda b, h, _m=mask_blocks: (b % _m, 0, 0)))  # shift mask
        inputs.append(mask_arr)
    in_specs += [
        pl.BlockSpec((1, hd, C), lambda b, h: (h, 0, 0)),       # wproj
        pl.BlockSpec((1, C), lambda b, h: (0, 0)),              # bproj
    ]
    inputs += [wproj, bproj]

    # Advisory cost model for the XLA scheduler.
    flops = int(B_ * nH * (8 * N * C * hd + 4 * N * N * hd))
    transcendentals = int(B_ * nH * (N * N + 2 * N))
    bytes_accessed = int(4 * (2 * B_ * N * C
                              + nblk * nH * N * N
                              + (B_ * N * N if has_mask else 0)
                              + nH * (4 * C * hd + 2 * hd + 1) + C))

    out = pl.pallas_call(
        functools.partial(_window_attention_kernel, has_mask),
        out_shape=jax.ShapeDtypeStruct((B_, N, C), x.dtype),
        grid_spec=pltpu.PrefetchScalarGridSpec(
            num_scalar_prefetch=0,
            grid=(nblk, nH),
            in_specs=in_specs,
            out_specs=pl.BlockSpec((WB, N, C), lambda b, h: (b, 0, 0)),
            scratch_shapes=[pltpu.VMEM((WB, N, C), jnp.float32)],
        ),
        compiler_params=pltpu.CompilerParams(
            dimension_semantics=("parallel", "arbitrary"),
        ),
        cost_estimate=pl.CostEstimate(
            flops=flops,
            transcendentals=transcendentals,
            bytes_accessed=bytes_accessed,
        ),
    )(*inputs)
    return out


# ---------------------------------------------------------------------------
# Pure-JAX reference (mirrors the PyTorch forward exactly) for validation.
# ---------------------------------------------------------------------------
def reference_forward(x, qkv_weight, q_bias, v_bias, logit_scale,
                      cpb_w1, cpb_b1, cpb_w2, proj_weight, proj_bias,
                      window_size, num_heads, mask=None, v_length=None,
                      pretrained_window_size=(0, 0)):
    B_, N, C = x.shape
    nH = num_heads
    hd = C // nH
    qkv_bias = jnp.concatenate([q_bias, jnp.zeros_like(v_bias), v_bias])
    qkv = x @ qkv_weight.T + qkv_bias
    qkv = qkv.reshape(B_, N, 3, nH, hd).transpose(2, 0, 3, 1, 4)
    q, k, v = qkv[0], qkv[1], qkv[2]
    qn = q / jnp.maximum(jnp.linalg.norm(q, axis=-1, keepdims=True), 1e-12)
    kn = k / jnp.maximum(jnp.linalg.norm(k, axis=-1, keepdims=True), 1e-12)
    attn = qn @ jnp.swapaxes(kn, -2, -1)
    scale = jnp.exp(jnp.minimum(logit_scale, jnp.log(1.0 / 0.01)))
    attn = attn * scale
    table_np, rpi_np = _relative_tables(window_size, pretrained_window_size)
    hidden = jnp.maximum(jnp.asarray(table_np) @ cpb_w1.T + cpb_b1, 0.0)
    bias_table = hidden @ cpb_w2.T                                   # (T, nH)
    rpb = bias_table[rpi_np.reshape(-1)].reshape(N, N, nH).transpose(2, 0, 1)
    rpb = 16.0 * jax.nn.sigmoid(rpb)
    vl = N if v_length is None else v_length
    attn = attn.at[..., :vl, :vl].add(rpb[None, :, :vl, :vl])
    if mask is not None:
        nW = mask.shape[0]
        attn = attn.reshape(B_ // nW, nW, nH, N, N) + mask[None, :, None]
        attn = attn.reshape(-1, nH, N, N)
    attn = jax.nn.softmax(attn, axis=-1)
    out = jnp.swapaxes(attn @ v, 1, 2).reshape(B_, N, C)
    out = out @ proj_weight.T + proj_bias
    return out


if __name__ == "__main__":
    # Small shapes consistent with the module: dim=32, 2 heads, 8x8 window,
    # 2 batch elements x 2 windows each.
    dim = 32
    num_heads = 2
    window_size = (8, 8)
    N = window_size[0] * window_size[1]        # 64 tokens per window
    nW = 2                                     # distinct shift masks
    batch = 2
    B_ = batch * nW                            # num_windows * B = 4

    key = jax.random.PRNGKey(0)
    ks = jax.random.split(key, 10)

    x = jax.random.normal(ks[0], (B_, N, dim), dtype=jnp.float32)
    qkv_weight = 0.05 * jax.random.normal(ks[1], (3 * dim, dim), dtype=jnp.float32)
    q_bias = 0.1 * jax.random.normal(ks[2], (dim,), dtype=jnp.float32)
    v_bias = 0.1 * jax.random.normal(ks[3], (dim,), dtype=jnp.float32)
    logit_scale = jnp.log(10.0 * jnp.ones((num_heads, 1, 1), dtype=jnp.float32))
    cpb_w1 = 0.05 * jax.random.normal(ks[4], (512, 2), dtype=jnp.float32)
    cpb_b1 = 0.05 * jax.random.normal(ks[5], (512,), dtype=jnp.float32)
    cpb_w2 = 0.05 * jax.random.normal(ks[6], (num_heads, 512), dtype=jnp.float32)
    proj_weight = 0.05 * jax.random.normal(ks[7], (dim, dim), dtype=jnp.float32)
    proj_bias = 0.1 * jax.random.normal(ks[8], (dim,), dtype=jnp.float32)
    mask = jnp.where(jax.random.uniform(ks[9], (nW, N, N)) > 0.5,
                     0.0, -100.0).astype(jnp.float32)

    args = (x, qkv_weight, q_bias, v_bias, logit_scale,
            cpb_w1, cpb_b1, cpb_w2, proj_weight, proj_bias,
            window_size, num_heads)

    # --- non-shifted windows (no mask) ---
    out = window_attention_forward(*args, mask=None, v_length=None)
    out = jax.block_until_ready(out)
    ref = reference_forward(*args, mask=None, v_length=None)
    assert out.shape == (B_, N, dim)
    assert jnp.allclose(out, ref, atol=1e-3, rtol=1e-3), \
        float(jnp.max(jnp.abs(out - ref)))

    # --- shifted windows (additive 0/-100 mask) ---
    out_m = window_attention_forward(*args, mask=mask, v_length=None)
    out_m = jax.block_until_ready(out_m)
    ref_m = reference_forward(*args, mask=mask, v_length=None)
    assert jnp.allclose(out_m, ref_m, atol=1e-3, rtol=1e-3), \
        float(jnp.max(jnp.abs(out_m - ref_m)))

    print("KERNEL_OK")
</pallas_src>

<mosaic_0001>
module attributes {stable_mosaic.version = 11 : i64} {
  func.func @_cpb_mlp_kernel(%arg0: memref<225x1xf32, #tpu.memory_space<vmem>>, %arg1: memref<225x1xf32, #tpu.memory_space<vmem>>, %arg2: memref<1x512xf32, #tpu.memory_space<vmem>>, %arg3: memref<1x512xf32, #tpu.memory_space<vmem>>, %arg4: memref<1x512xf32, #tpu.memory_space<vmem>>, %arg5: memref<512x2xf32, #tpu.memory_space<vmem>>, %arg6: memref<225x2xf32, #tpu.memory_space<vmem>>) attributes {dimension_semantics = [], scalar_prefetch = 0 : i64, scratch_operands = 0 : i64, tpu.core_type = #tpu.core_type<tc>} {
    %c0 = arith.constant 0 : index
    %c0_0 = arith.constant 0 : index
    %0 = vector.load %arg0[%c0, %c0_0] : memref<225x1xf32, #tpu.memory_space<vmem>>, vector<225x1xf32>
    %c0_1 = arith.constant 0 : index
    %c0_2 = arith.constant 0 : index
    %1 = vector.load %arg2[%c0_1, %c0_2] : memref<1x512xf32, #tpu.memory_space<vmem>>, vector<1x512xf32>
    %2 = vector.broadcast %0 : vector<225x1xf32> to vector<225x512xf32>
    %3 = vector.broadcast %1 : vector<1x512xf32> to vector<225x512xf32>
    %4 = arith.mulf %2, %3 : vector<225x512xf32>
    %c0_3 = arith.constant 0 : index
    %c0_4 = arith.constant 0 : index
    %5 = vector.load %arg1[%c0_3, %c0_4] : memref<225x1xf32, #tpu.memory_space<vmem>>, vector<225x1xf32>
    %c0_5 = arith.constant 0 : index
    %c0_6 = arith.constant 0 : index
    %6 = vector.load %arg3[%c0_5, %c0_6] : memref<1x512xf32, #tpu.memory_space<vmem>>, vector<1x512xf32>
    %7 = vector.broadcast %5 : vector<225x1xf32> to vector<225x512xf32>
    %8 = vector.broadcast %6 : vector<1x512xf32> to vector<225x512xf32>
    %9 = arith.mulf %7, %8 : vector<225x512xf32>
    %10 = arith.addf %4, %9 : vector<225x512xf32>
    %c0_7 = arith.constant 0 : index
    %c0_8 = arith.constant 0 : index
    %11 = vector.load %arg4[%c0_7, %c0_8] : memref<1x512xf32, #tpu.memory_space<vmem>>, vector<1x512xf32>
    %12 = vector.broadcast %11 : vector<1x512xf32> to vector<225x512xf32>
    %13 = arith.addf %10, %12 : vector<225x512xf32>
    %cst = arith.constant 0.000000e+00 : f32
    %14 = vector.broadcast %cst : f32 to vector<225x512xf32>
    %15 = arith.maximumf %13, %14 : vector<225x512xf32>
    %c0_9 = arith.constant 0 : index
    %c0_10 = arith.constant 0 : index
    %16 = vector.load %arg5[%c0_9, %c0_10] : memref<512x2xf32, #tpu.memory_space<vmem>>, vector<512x2xf32>
    %cst_11 = arith.constant dense<0.000000e+00> : vector<225x2xf32>
    %17 = tpu.matmul %15, %16, %cst_11 {dimension_numbers = #tpu.dot_dimension_numbers<[1], [0], [0], [1], [0, 0, 1, 1], [], []>} : vector<225x512xf32>, vector<512x2xf32>, vector<225x2xf32> -> vector<225x2xf32>
    %c0_12 = arith.constant 0 : index
    %c0_13 = arith.constant 0 : index
    %18 = vector.load %arg6[%c0_12, %c0_13] : memref<225x2xf32, #tpu.memory_space<vmem>>, vector<225x2xf32>
    tpu.vector_store %arg6[%c0_12, %c0_13], %17 {strides = array<i32>} : memref<225x2xf32, #tpu.memory_space<vmem>>, vector<225x2xf32>,
    return
  }
}

</mosaic_0001>

<llo_original>
// kernel: tpu_custom_call.1
$region0: #{tpu_custom_call.1}
  #allocation0 [shape = 'u32[]', space=smem, size = 0x4, offset = 0x4, fixed_abs, tag = 'smem constant byte address 0x4 - core index']
  #allocation1 [shape = 'u32[144,128]{1,0:T(1,128)}', space=vmem, size = 0x12000, scoped, tag = 'internal scratch']
  %s0 = inlined_call_operand.vmem [shape: f32[225,1], index: 0, kind: input, shape index: {}]
  %s1 = inlined_call_operand.vmem [shape: f32[225,1], index: 1, kind: input, shape index: {}]
  %s2 = inlined_call_operand.vmem [shape: f32[1,512], index: 2, kind: input, shape index: {}]
  %s3 = inlined_call_operand.vmem [shape: f32[1,512], index: 3, kind: input, shape index: {}]
  %s4 = inlined_call_operand.vmem [shape: f32[1,512], index: 4, kind: input, shape index: {}]
  %s5 = inlined_call_operand.vmem [shape: f32[512,2], index: 5, kind: input, shape index: {}]
  %s6 = inlined_call_operand.vmem [shape: f32[225,2], index: 6, kind: output, shape index: {}]
  %s7 = sld [smem:[#allocation0]]
  $region34: #{tpu_custom_call.1} parent=0
    _
  %s9 = ssub.s32 1, %s7
  %s10 = scalar_select 0, %s9, %s7
  // Predicated region
  $region2: #{tpu_custom_call.1} parent=0 // pred_check
    _
  $region3: #{tpu_custom_call.1} parent=0 // pred_check_branch
    %12 = sbr.rel (0) target = $region5
  $region4: #{tpu_custom_call.1} parent=0 // pred_region
    _
  $region5: #{tpu_custom_call.1} parent=0 // pred_fallthru
    _
  // Predicated region
  $region6: #{tpu_custom_call.1} parent=0 // pred_check
    _
  $region7: #{tpu_custom_call.1} parent=0 // pred_check_branch
    %14 = sbr.rel (0) target = $region9
  $region8: #{tpu_custom_call.1} parent=0 // pred_region
    _
  $region9: #{tpu_custom_call.1} parent=0 // pred_fallthru
    _
  // Predicated region
  $region10: #{tpu_custom_call.1} parent=0 // pred_check
    _
  $region11: #{tpu_custom_call.1} parent=0 // pred_check_branch
    %16 = sbr.rel (0) target = $region13
  $region12: #{tpu_custom_call.1} parent=0 // pred_region
    _
  $region13: #{tpu_custom_call.1} parent=0 // pred_fallthru
    _
  // Predicated region
  $region14: #{tpu_custom_call.1} parent=0 // pred_check
    _
  $region15: #{tpu_custom_call.1} parent=0 // pred_check_branch
    %18 = sbr.rel (0) target = $region17
  $region16: #{tpu_custom_call.1} parent=0 // pred_region
    _
  $region17: #{tpu_custom_call.1} parent=0 // pred_fallthru
    _
  // Predicated region
  $region18: #{tpu_custom_call.1} parent=0 // pred_check
    _
  $region19: #{tpu_custom_call.1} parent=0 // pred_check_branch
    %20 = sbr.rel (0) target = $region21
  $region20: #{tpu_custom_call.1} parent=0 // pred_region
    _
  $region21: #{tpu_custom_call.1} parent=0 // pred_fallthru
    _
  // Predicated region
  $region22: #{tpu_custom_call.1} parent=0 // pred_check
    _
  $region23: #{tpu_custom_call.1} parent=0 // pred_check_branch
    %22 = sbr.rel (0) target = $region25
  $region24: #{tpu_custom_call.1} parent=0 // pred_region
    _
  $region25: #{tpu_custom_call.1} parent=0 // pred_fallthru
    _
  %v23 = vld [vmem:[%s0] sm:$0xff]
  %v24 = vld [vmem:[%s0 + $0x8] sm:$0xff]
  %v25 = vld [vmem:[%s0 + $0x10] sm:$0xff]
  %v26 = vld [vmem:[%s0 + $0x18] sm:$0xff]
  %v27 = vld [vmem:[%s0 + $0x20] sm:$0xff]
  %v28 = vld [vmem:[%s0 + $0x28] sm:$0xff]
  %v29 = vld [vmem:[%s0 + $0x30] sm:$0xff]
  %v30 = vld [vmem:[%s0 + $0x38] sm:$0xff]
  %v31 = vld [vmem:[%s0 + $0x40] sm:$0xff]
  %v32 = vld [vmem:[%s0 + $0x48] sm:$0xff]
  %v33 = vld [vmem:[%s0 + $0x50] sm:$0xff]
  %v34 = vld [vmem:[%s0 + $0x58] sm:$0xff]
  %v35 = vld [vmem:[%s0 + $0x60] sm:$0xff]
  %v36 = vld [vmem:[%s0 + $0x68] sm:$0xff]
  %v37 = vld [vmem:[%s0 + $0x70] sm:$0xff]
  %v38 = vld [vmem:[%s0 + $0x78] sm:$0xff]
  %v39 = vld [vmem:[%s0 + $0x80] sm:$0xff]
  %v40 = vld [vmem:[%s0 + $0x88] sm:$0xff]
  %v41 = vld [vmem:[%s0 + $0x90] sm:$0xff]
  %v42 = vld [vmem:[%s0 + $0x98] sm:$0xff]
  %v43 = vld [vmem:[%s0 + $0xa0] sm:$0xff]
  %v44 = vld [vmem:[%s0 + $0xa8] sm:$0xff]
  %v45 = vld [vmem:[%s0 + $0xb0] sm:$0xff]
  %v46 = vld [vmem:[%s0 + $0xb8] sm:$0xff]
  %v47 = vld [vmem:[%s0 + $0xc0] sm:$0xff]
  %v48 = vld [vmem:[%s0 + $0xc8] sm:$0xff]
  %v49 = vld [vmem:[%s0 + $0xd0] sm:$0xff]
  %v50 = vld [vmem:[%s0 + $0xd8] sm:$0xff]
  %v51 = vld [vmem:[%s0 + $0xe0] sm:$0x1]
  %v52 = vld [vmem:[%s2] sm:$0xf]
  %54 = vset.pattern.permute.xlu0 0
  %55 = vperm.xlu0 %54, %v23
  %v56 = vpop.permute.xlu0 %55
  %59 = vset.pattern.permute.xlu0 0
  %60 = vperm.xlu0 %59, %v24
  %v61 = vpop.permute.xlu0 %60
  %64 = vset.pattern.permute.xlu0 0
  %65 = vperm.xlu0 %64, %v25
  %v66 = vpop.permute.xlu0 %65
  %69 = vset.pattern.permute.xlu0 0
  %70 = vperm.xlu0 %69, %v26
  %v71 = vpop.permute.xlu0 %70
  %74 = vset.pattern.permute.xlu0 0
  %75 = vperm.xlu0 %74, %v27
  %v76 = vpop.permute.xlu0 %75
  %79 = vset.pattern.permute.xlu0 0
  %80 = vperm.xlu0 %79, %v28
  %v81 = vpop.permute.xlu0 %80
  %84 = vset.pattern.permute.xlu0 0
  %85 = vperm.xlu0 %84, %v29
  %v86 = vpop.permute.xlu0 %85
  %89 = vset.pattern.permute.xlu0 0
  %90 = vperm.xlu0 %89, %v30
  %v91 = vpop.permute.xlu0 %90
  %94 = vset.pattern.permute.xlu0 0
  %95 = vperm.xlu0 %94, %v31
  %v96 = vpop.permute.xlu0 %95
  %99 = vset.pattern.permute.xlu0 0
  %100 = vperm.xlu0 %99, %v32
  %v101 = vpop.permute.xlu0 %100
  %104 = vset.pattern.permute.xlu0 0
  %105 = vperm.xlu0 %104, %v33
  %v106 = vpop.permute.xlu0 %105
  %109 = vset.pattern.permute.xlu0 0
  %110 = vperm.xlu0 %109, %v34
  %v111 = vpop.permute.xlu0 %110
  %114 = vset.pattern.permute.xlu0 0
  %115 = vperm.xlu0 %114, %v35
  %v116 = vpop.permute.xlu0 %115
  %119 = vset.pattern.permute.xlu0 0
  %120 = vperm.xlu0 %119, %v36
  %v121 = vpop.permute.xlu0 %120
  %124 = vset.pattern.permute.xlu0 0
  %125 = vperm.xlu0 %124, %v37
  %v126 = vpop.permute.xlu0 %125
  %129 = vset.pattern.permute.xlu0 0
  %130 = vperm.xlu0 %129, %v38
  %v131 = vpop.permute.xlu0 %130
  %134 = vset.pattern.permute.xlu0 0
  %135 = vperm.xlu0 %134, %v39
  %v136 = vpop.permute.xlu0 %135
  %139 = vset.pattern.permute.xlu0 0
  %140 = vperm.xlu0 %139, %v40
  %v141 = vpop.permute.xlu0 %140
  %144 = vset.pattern.permute.xlu0 0
  %145 = vperm.xlu0 %144, %v41
  %v146 = vpop.permute.xlu0 %145
  %149 = vset.pattern.permute.xlu0 0
  %150 = vperm.xlu0 %149, %v42
  %v151 = vpop.permute.xlu0 %150
  %154 = vset.pattern.permute.xlu0 0
  %155 = vperm.xlu0 %154, %v43
  %v156 = vpop.permute.xlu0 %155
  %159 = vset.pattern.permute.xlu0 0
  %160 = vperm.xlu0 %159, %v44
  %v161 = vpop.permute.xlu0 %160
  %164 = vset.pattern.permute.xlu0 0
  %165 = vperm.xlu0 %164, %v45
  %v166 = vpop.permute.xlu0 %165
  %169 = vset.pattern.permute.xlu0 0
  %170 = vperm.xlu0 %169, %v46
  %v171 = vpop.permute.xlu0 %170
  %174 = vset.pattern.permute.xlu0 0
  %175 = vperm.xlu0 %174, %v47
  %v176 = vpop.permute.xlu0 %175
  %179 = vset.pattern.permute.xlu0 0
  %180 = vperm.xlu0 %179, %v48
  %v181 = vpop.permute.xlu0 %180
  %184 = vset.pattern.permute.xlu0 0
  %185 = vperm.xlu0 %184, %v49
  %v186 = vpop.permute.xlu0 %185
  %189 = vset.pattern.permute.xlu0 0
  %190 = vperm.xlu0 %189, %v50
  %v191 = vpop.permute.xlu0 %190
  %194 = vset.pattern.permute.xlu0 0
  %195 = vperm.xlu0 %194, %v51
  %v196 = vpop.permute.xlu0 %195
  %v199 = vlaneseq
  %v200 = vshrl.u32 %v199, 7
  %v201 = vsub.s32 0, %v200
  %v202 = vrot.slane %v52, %v201
  %v203 = vlaneseq
  %v204 = vshrl.u32 %v203, 7
  %v205 = vsub.s32 1, %v204
  %v206 = vrot.slane %v52, %v205
  %v207 = vlaneseq
  %v208 = vshrl.u32 %v207, 7
  %v209 = vsub.s32 2, %v208
  %v210 = vrot.slane %v52, %v209
  %v211 = vlaneseq
  %v212 = vshrl.u32 %v211, 7
  %v213 = vsub.s32 3, %v212
  %v214 = vrot.slane %v52, %v213
  %v219 = vmul.f32 %v56, %v202
  %v220 = vmul.f32 %v56, %v206
  %v221 = vmul.f32 %v56, %v210
  %v222 = vmul.f32 %v56, %v214
  %v223 = vmul.f32 %v61, %v202
  %v224 = vmul.f32 %v61, %v206
  %v225 = vmul.f32 %v61, %v210
  %v226 = vmul.f32 %v61, %v214
  %v227 = vmul.f32 %v66, %v202
  %v228 = vmul.f32 %v66, %v206
  %v229 = vmul.f32 %v66, %v210
  %v230 = vmul.f32 %v66, %v214
  %v231 = vmul.f32 %v71, %v202
  %v232 = vmul.f32 %v71, %v206
  %v233 = vmul.f32 %v71, %v210
  %v234 = vmul.f32 %v71, %v214
  %v235 = vmul.f32 %v76, %v202
  %v236 = vmul.f32 %v76, %v206
  %v237 = vmul.f32 %v76, %v210
  %v238 = vmul.f32 %v76, %v214
  %v239 = vmul.f32 %v81, %v202
  %v240 = vmul.f32 %v81, %v206
  %v241 = vmul.f32 %v81, %v210
  %v242 = vmul.f32 %v81, %v214
  %v243 = vmul.f32 %v86, %v202
  %v244 = vmul.f32 %v86, %v206
  %v245 = vmul.f32 %v86, %v210
  %v246 = vmul.f32 %v86, %v214
  %v247 = vmul.f32 %v91, %v202
  %v248 = vmul.f32 %v91, %v206
  %v249 = vmul.f32 %v91, %v210
  %v250 = vmul.f32 %v91, %v214
  %v251 = vmul.f32 %v96, %v202
  %v252 = vmul.f32 %v96, %v206
  %v253 = vmul.f32 %v96, %v210
  %v254 = vmul.f32 %v96, %v214
  %v255 = vmul.f32 %v101, %v202
  %v256 = vmul.f32 %v101, %v206
  %v257 = vmul.f32 %v101, %v210
  %v258 = vmul.f32 %v101, %v214
  %v259 = vmul.f32 %v106, %v202
  %v260 = vmul.f32 %v106, %v206
  %v261 = vmul.f32 %v106, %v210
  %v262 = vmul.f32 %v106, %v214
  %v263 = vmul.f32 %v111, %v202
  %v264 = vmul.f32 %v111, %v206
  %v265 = vmul.f32 %v111, %v210
  %v266 = vmul.f32 %v111, %v214
  %v267 = vmul.f32 %v116, %v202
  %v268 = vmul.f32 %v116, %v206
  %v269 = vmul.f32 %v116, %v210
  %v270 = vmul.f32 %v116, %v214
  %v271 = vmul.f32 %v121, %v202
  %v272 = vmul.f32 %v121, %v206
  %v273 = vmul.f32 %v121, %v210
  %v274 = vmul.f32 %v121, %v214
  %v275 = vmul.f32 %v126, %v202
  %v276 = vmul.f32 %v126, %v206
  %v277 = vmul.f32 %v126, %v210
  %v278 = vmul.f32 %v126, %v214
  %v279 = vmul.f32 %v131, %v202
  %v280 = vmul.f32 %v131, %v206
  %v281 = vmul.f32 %v131, %v210
  %v282 = vmul.f32 %v131, %v214
  %v283 = vmul.f32 %v136, %v202
  %v284 = vmul.f32 %v136, %v206
  %v285 = vmul.f32 %v136, %v210
  %v286 = vmul.f32 %v136, %v214
  %v287 = vmul.f32 %v141, %v202
  %v288 = vmul.f32 %v141, %v206
  %v289 = vmul.f32 %v141, %v210
  %v290 = vmul.f32 %v141, %v214
  %v291 = vmul.f32 %v146, %v202
  %v292 = vmul.f32 %v146, %v206
  %v293 = vmul.f32 %v146, %v210
  %v294 = vmul.f32 %v146, %v214
  %v295 = vmul.f32 %v151, %v202
  %v296 = vmul.f32 %v151, %v206
  %v297 = vmul.f32 %v151, %v210
  %v298 = vmul.f32 %v151, %v214
  %v299 = vmul.f32 %v156, %v202
  %v300 = vmul.f32 %v156, %v206
  %v301 = vmul.f32 %v156, %v210
  %v302 = vmul.f32 %v156, %v214
  %v303 = vmul.f32 %v161, %v202
  %v304 = vmul.f32 %v161, %v206
  %v305 = vmul.f32 %v161, %v210
  %v306 = vmul.f32 %v161, %v214
  %v307 = vmul.f32 %v166, %v202
  %v308 = vmul.f32 %v166, %v206
  %v309 = vmul.f32 %v166, %v210
  %v310 = vmul.f32 %v166, %v214
  %v311 = vmul.f32 %v171, %v202
  %v312 = vmul.f32 %v171, %v206
  %v313 = vmul.f32 %v171, %v210
  %v314 = vmul.f32 %v171, %v214
  %v315 = vmul.f32 %v176, %v202
  %v316 = vmul.f32 %v176, %v206
  %v317 = vmul.f32 %v176, %v210
  %v318 = vmul.f32 %v176, %v214
  %v319 = vmul.f32 %v181, %v202
  %v320 = vmul.f32 %v181, %v206
  %v321 = vmul.f32 %v181, %v210
  %v322 = vmul.f32 %v181, %v214
  %v323 = vmul.f32 %v186, %v202
  %v324 = vmul.f32 %v186, %v206
  %v325 = vmul.f32 %v186, %v210
  %v326 = vmul.f32 %v186, %v214
  %v327 = vmul.f32 %v191, %v202
  %v328 = vmul.f32 %v191, %v206
  %v329 = vmul.f32 %v191, %v210
  %v330 = vmul.f32 %v191, %v214
  %v331 = vmul.f32 %v196, %v202
  %v332 = vmul.f32 %v196, %v206
  %v333 = vmul.f32 %v196, %v210
  %v334 = vmul.f32 %v196, %v214
  %v335 = vld [vmem:[%s1] sm:$0xff]
  %v336 = vld [vmem:[%s1 + $0x8] sm:$0xff]
  %v337 = vld [vmem:[%s1 + $0x10] sm:$0xff]
  %v338 = vld [vmem:[%s1 + $0x18] sm:$0xff]
  %v339 = vld [vmem:[%s1 + $0x20] sm:$0xff]
  %v340 = vld [vmem:[%s1 + $0x28] sm:$0xff]
  %v341 = vld [vmem:[%s1 + $0x30] sm:$0xff]
  %v342 = vld [vmem:[%s1 + $0x38] sm:$0xff]
  %v343 = vld [vmem:[%s1 + $0x40] sm:$0xff]
  %v344 = vld [vmem:[%s1 + $0x48] sm:$0xff]
  %v345 = vld [vmem:[%s1 + $0x50] sm:$0xff]
  %v346 = vld [vmem:[%s1 + $0x58] sm:$0xff]
  %v347 = vld [vmem:[%s1 + $0x60] sm:$0xff]
  %v348 = vld [vmem:[%s1 + $0x68] sm:$0xff]
  %v349 = vld [vmem:[%s1 + $0x70] sm:$0xff]
  %v350 = vld [vmem:[%s1 + $0x78] sm:$0xff]
  %v351 = vld [vmem:[%s1 + $0x80] sm:$0xff]
  %v352 = vld [vmem:[%s1 + $0x88] sm:$0xff]
  %v353 = vld [vmem:[%s1 + $0x90] sm:$0xff]
  %v354 = vld [vmem:[%s1 + $0x98] sm:$0xff]
  %v355 = vld [vmem:[%s1 + $0xa0] sm:$0xff]
  %v356 = vld [vmem:[%s1 + $0xa8] sm:$0xff]
  %v357 = vld [vmem:[%s1 + $0xb0] sm:$0xff]
  %v358 = vld [vmem:[%s1 + $0xb8] sm:$0xff]
  %v359 = vld [vmem:[%s1 + $0xc0] sm:$0xff]
  %v360 = vld [vmem:[%s1 + $0xc8] sm:$0xff]
  %v361 = vld [vmem:[%s1 + $0xd0] sm:$0xff]
  %v362 = vld [vmem:[%s1 + $0xd8] sm:$0xff]
  %v363 = vld [vmem:[%s1 + $0xe0] sm:$0x1]
  %v364 = vld [vmem:[%s3] sm:$0xf]
  %366 = vset.pattern.permute.xlu0 0
  %367 = vperm.xlu0 %366, %v335
  %v368 = vpop.permute.xlu0 %367
  %371 = vset.pattern.permute.xlu0 0
  %372 = vperm.xlu0 %371, %v336
  %v373 = vpop.permute.xlu0 %372
  %376 = vset.pattern.permute.xlu0 0
  %377 = vperm.xlu0 %376, %v337
  %v378 = vpop.permute.xlu0 %377
  %381 = vset.pattern.permute.xlu0 0
  %382 = vperm.xlu0 %381, %v338
  %v383 = vpop.permute.xlu0 %382
  %386 = vset.pattern.permute.xlu0 0
  %387 = vperm.xlu0 %386, %v339
  %v388 = vpop.permute.xlu0 %387
  %391 = vset.pattern.permute.xlu0 0
  %392 = vperm.xlu0 %391, %v340
  %v393 = vpop.permute.xlu0 %392
  %396 = vset.pattern.permute.xlu0 0
  %397 = vperm.xlu0 %396, %v341
  %v398 = vpop.permute.xlu0 %397
  %401 = vset.pattern.permute.xlu0 0
  %402 = vperm.xlu0 %401, %v342
  %v403 = vpop.permute.xlu0 %402
  %406 = vset.pattern.permute.xlu0 0
  %407 = vperm.xlu0 %406, %v343
  %v408 = vpop.permute.xlu0 %407
  %411 = vset.pattern.permute.xlu0 0
  %412 = vperm.xlu0 %411, %v344
  %v413 = vpop.permute.xlu0 %412
  %416 = vset.pattern.permute.xlu0 0
  %417 = vperm.xlu0 %416, %v345
  %v418 = vpop.permute.xlu0 %417
  %421 = vset.pattern.permute.xlu0 0
  %422 = vperm.xlu0 %421, %v346
  %v423 = vpop.permute.xlu0 %422
  %426 = vset.pattern.permute.xlu0 0
  %427 = vperm.xlu0 %426, %v347
  %v428 = vpop.permute.xlu0 %427
  %431 = vset.pattern.permute.xlu0 0
  %432 = vperm.xlu0 %431, %v348
  %v433 = vpop.permute.xlu0 %432
  %436 = vset.pattern.permute.xlu0 0
  %437 = vperm.xlu0 %436, %v349
  %v438 = vpop.permute.xlu0 %437
  %441 = vset.pattern.permute.xlu0 0
  %442 = vperm.xlu0 %441, %v350
  %v443 = vpop.permute.xlu0 %442
  %446 = vset.pattern.permute.xlu0 0
  %447 = vperm.xlu0 %446, %v351
  %v448 = vpop.permute.xlu0 %447
  %451 = vset.pattern.permute.xlu0 0
  %452 = vperm.xlu0 %451, %v352
  %v453 = vpop.permute.xlu0 %452
  %456 = vset.pattern.permute.xlu0 0
  %457 = vperm.xlu0 %456, %v353
  %v458 = vpop.permute.xlu0 %457
  %461 = vset.pattern.permute.xlu0 0
  %462 = vperm.xlu0 %461, %v354
  %v463 = vpop.permute.xlu0 %462
  %466 = vset.pattern.permute.xlu0 0
  %467 = vperm.xlu0 %466, %v355
  %v468 = vpop.permute.xlu0 %467
  %471 = vset.pattern.permute.xlu0 0
  %472 = vperm.xlu0 %471, %v356
  %v473 = vpop.permute.xlu0 %472
  %476 = vset.pattern.permute.xlu0 0
  %477 = vperm.xlu0 %476, %v357
  %v478 = vpop.permute.xlu0 %477
  %481 = vset.pattern.permute.xlu0 0
  %482 = vperm.xlu0 %481, %v358
  %v483 = vpop.permute.xlu0 %482
  %486 = vset.pattern.permute.xlu0 0
  %487 = vperm.xlu0 %486, %v359
  %v488 = vpop.permute.xlu0 %487
  %491 = vset.pattern.permute.xlu0 0
  %492 = vperm.xlu0 %491, %v360
  %v493 = vpop.permute.xlu0 %492
  %496 = vset.pattern.permute.xlu0 0
  %497 = vperm.xlu0 %496, %v361
  %v498 = vpop.permute.xlu0 %497
  %501 = vset.pattern.permute.xlu0 0
  %502 = vperm.xlu0 %501, %v362
  %v503 = vpop.permute.xlu0 %502
  %506 = vset.pattern.permute.xlu0 0
  %507 = vperm.xlu0 %506, %v363
  %v508 = vpop.permute.xlu0 %507
  %v511 = vlaneseq
  %v512 = vshrl.u32 %v511, 7
  %v513 = vsub.s32 0, %v512
  %v514 = vrot.slane %v364, %v513
  %v515 = vlaneseq
  %v516 = vshrl.u32 %v515, 7
  %v517 = vsub.s32 1, %v516
  %v518 = vrot.slane %v364, %v517
  %v519 = vlaneseq
  %v520 = vshrl.u32 %v519, 7
  %v521 = vsub.s32 2, %v520
  %v522 = vrot.slane %v364, %v521
  %v523 = vlaneseq
  %v524 = vshrl.u32 %v523, 7
  %v525 = vsub.s32 3, %v524
  %v526 = vrot.slane %v364, %v525
  %v531 = vmul.f32 %v368, %v514
  %v532 = vmul.f32 %v368, %v518
  %v533 = vmul.f32 %v368, %v522
  %v534 = vmul.f32 %v368, %v526
  %v535 = vmul.f32 %v373, %v514
  %v536 = vmul.f32 %v373, %v518
  %v537 = vmul.f32 %v373, %v522
  %v538 = vmul.f32 %v373, %v526
  %v539 = vmul.f32 %v378, %v514
  %v540 = vmul.f32 %v378, %v518
  %v541 = vmul.f32 %v378, %v522
  %v542 = vmul.f32 %v378, %v526
  %v543 = vmul.f32 %v383, %v514
  %v544 = vmul.f32 %v383, %v518
  %v545 = vmul.f32 %v383, %v522
  %v546 = vmul.f32 %v383, %v526
  %v547 = vmul.f32 %v388, %v514
  %v548 = vmul.f32 %v388, %v518
  %v549 = vmul.f32 %v388, %v522
  %v550 = vmul.f32 %v388, %v526
  %v551 = vmul.f32 %v393, %v514
  %v552 = vmul.f32 %v393, %v518
  %v553 = vmul.f32 %v393, %v522
  %v554 = vmul.f32 %v393, %v526
  %v555 = vmul.f32 %v398, %v514
  %v556 = vmul.f32 %v398, %v518
  %v557 = vmul.f32 %v398, %v522
  %v558 = vmul.f32 %v398, %v526
  %v559 = vmul.f32 %v403, %v514
  %v560 = vmul.f32 %v403, %v518
  %v561 = vmul.f32 %v403, %v522
  %v562 = vmul.f32 %v403, %v526
  %v563 = vmul.f32 %v408, %v514
  %v564 = vmul.f32 %v408, %v518
  %v565 = vmul.f32 %v408, %v522
  %v566 = vmul.f32 %v408, %v526
  %v567 = vmul.f32 %v413, %v514
  %v568 = vmul.f32 %v413, %v518
  %v569 = vmul.f32 %v413, %v522
  %v570 = vmul.f32 %v413, %v526
  %v571 = vmul.f32 %v418, %v514
  %v572 = vmul.f32 %v418, %v518
  %v573 = vmul.f32 %v418, %v522
  %v574 = vmul.f32 %v418, %v526
  %v575 = vmul.f32 %v423, %v514
  %v576 = vmul.f32 %v423, %v518
  %v577 = vmul.f32 %v423, %v522
  %v578 = vmul.f32 %v423, %v526
  %v579 = vmul.f32 %v428, %v514
  %v580 = vmul.f32 %v428, %v518
  %v581 = vmul.f32 %v428, %v522
  %v582 = vmul.f32 %v428, %v526
  %v583 = vmul.f32 %v433, %v514
  %v584 = vmul.f32 %v433, %v518
  %v585 = vmul.f32 %v433, %v522
  %v586 = vmul.f32 %v433, %v526
  %v587 = vmul.f32 %v438, %v514
  %v588 = vmul.f32 %v438, %v518
  %v589 = vmul.f32 %v438, %v522
  %v590 = vmul.f32 %v438, %v526
  %v591 = vmul.f32 %v443, %v514
  %v592 = vmul.f32 %v443, %v518
  %v593 = vmul.f32 %v443, %v522
  %v594 = vmul.f32 %v443, %v526
  %v595 = vmul.f32 %v448, %v514
  %v596 = vmul.f32 %v448, %v518
  %v597 = vmul.f32 %v448, %v522
  %v598 = vmul.f32 %v448, %v526
  %v599 = vmul.f32 %v453, %v514
  %v600 = vmul.f32 %v453, %v518
  %v601 = vmul.f32 %v453, %v522
  %v602 = vmul.f32 %v453, %v526
  %v603 = vmul.f32 %v458, %v514
  %v604 = vmul.f32 %v458, %v518
  %v605 = vmul.f32 %v458, %v522
  %v606 = vmul.f32 %v458, %v526
  %v607 = vmul.f32 %v463, %v514
  %v608 = vmul.f32 %v463, %v518
  %v609 = vmul.f32 %v463, %v522
  %v610 = vmul.f32 %v463, %v526
  %v611 = vmul.f32 %v468, %v514
  %v612 = vmul.f32 %v468, %v518
  %v613 = vmul.f32 %v468, %v522
  %v614 = vmul.f32 %v468, %v526
  %v615 = vmul.f32 %v473, %v514
  %v616 = vmul.f32 %v473, %v518
  %v617 = vmul.f32 %v473, %v522
  %v618 = vmul.f32 %v473, %v526
  %v619 = vmul.f32 %v478, %v514
  %v620 = vmul.f32 %v478, %v518
  %v621 = vmul.f32 %v478, %v522
  %v622 = vmul.f32 %v478, %v526
  %v623 = vmul.f32 %v483, %v514
  %v624 = vmul.f32 %v483, %v518
  %v625 = vmul.f32 %v483, %v522
  %v626 = vmul.f32 %v483, %v526
  %v627 = vmul.f32 %v488, %v514
  %v628 = vmul.f32 %v488, %v518
  %v629 = vmul.f32 %v488, %v522
  %v630 = vmul.f32 %v488, %v526
  %v631 = vmul.f32 %v493, %v514
  %v632 = vmul.f32 %v493, %v518
  %v633 = vmul.f32 %v493, %v522
  %v634 = vmul.f32 %v493, %v526
  %v635 = vmul.f32 %v498, %v514
  %v636 = vmul.f32 %v498, %v518
  %v637 = vmul.f32 %v498, %v522
  %v638 = vmul.f32 %v498, %v526
  %v639 = vmul.f32 %v503, %v514
  %v640 = vmul.f32 %v503, %v518
  %v641 = vmul.f32 %v503, %v522
  %v642 = vmul.f32 %v503, %v526
  %v643 = vmul.f32 %v508, %v514
  %v644 = vmul.f32 %v508, %v518
  %v645 = vmul.f32 %v508, %v522
  %v646 = vmul.f32 %v508, %v526
  %v647 = vadd.f32 %v219, %v531
  %v648 = vadd.f32 %v220, %v532
  %v649 = vadd.f32 %v221, %v533
  %v650 = vadd.f32 %v222, %v534
  %v651 = vadd.f32 %v223, %v535
  %v652 = vadd.f32 %v224, %v536
  %v653 = vadd.f32 %v225, %v537
  %v654 = vadd.f32 %v226, %v538
  %v655 = vadd.f32 %v227, %v539
  %v656 = vadd.f32 %v228, %v540
  %v657 = vadd.f32 %v229, %v541
  %v658 = vadd.f32 %v230, %v542
  %v659 = vadd.f32 %v231, %v543
  %v660 = vadd.f32 %v232, %v544
  %v661 = vadd.f32 %v233, %v545
  %v662 = vadd.f32 %v234, %v546
  %v663 = vadd.f32 %v235, %v547
  %v664 = vadd.f32 %v236, %v548
  %v665 = vadd.f32 %v237, %v549
  %v666 = vadd.f32 %v238, %v550
  %v667 = vadd.f32 %v239, %v551
  %v668 = vadd.f32 %v240, %v552
  %v669 = vadd.f32 %v241, %v553
  %v670 = vadd.f32 %v242, %v554
  %v671 = vadd.f32 %v243, %v555
  %v672 = vadd.f32 %v244, %v556
  %v673 = vadd.f32 %v245, %v557
  %v674 = vadd.f32 %v246, %v558
  %v675 = vadd.f32 %v247, %v559
  %v676 = vadd.f32 %v248, %v560
  %v677 = vadd.f32 %v249, %v561
  %v678 = vadd.f32 %v250, %v562
  %v679 = vadd.f32 %v251, %v563
  %v680 = vadd.f32 %v252, %v564
  %v681 = vadd.f32 %v253, %v565
  %v682 = vadd.f32 %v254, %v566
  %v683 = vadd.f32 %v255, %v567
  %v684 = vadd.f32 %v256, %v568
  %v685 = vadd.f32 %v257, %v569
  %v686 = vadd.f32 %v258, %v570
  %v687 = vadd.f32 %v259, %v571
  %v688 = vadd.f32 %v260, %v572
  %v689 = vadd.f32 %v261, %v573
  %v690 = vadd.f32 %v262, %v574
  %v691 = vadd.f32 %v263, %v575
  %v692 = vadd.f32 %v264, %v576
  %v693 = vadd.f32 %v265, %v577
  %v694 = vadd.f32 %v266, %v578
  %v695 = vadd.f32 %v267, %v579
  %v696 = vadd.f32 %v268, %v580
  %v697 = vadd.f32 %v269, %v581
  %v698 = vadd.f32 %v270, %v582
  %v699 = vadd.f32 %v271, %v583
  %v700 = vadd.f32 %v272, %v584
  %v701 = vadd.f32 %v273, %v585
  %v702 = vadd.f32 %v274, %v586
  %v703 = vadd.f32 %v275, %v587
  %v704 = vadd.f32 %v276, %v588
  %v705 = vadd.f32 %v277, %v589
  %v706 = vadd.f32 %v278, %v590
  %v707 = vadd.f32 %v279, %v591
  %v708 = vadd.f32 %v280, %v592
  %v709 = vadd.f32 %v281, %v593
  %v710 = vadd.f32 %v282, %v594
  %v711 = vadd.f32 %v283, %v595
  %v712 = vadd.f32 %v284, %v596
  %v713 = vadd.f32 %v285, %v597
  %v714 = vadd.f32 %v286, %v598
  %v715 = vadd.f32 %v287, %v599
  %v716 = vadd.f32 %v288, %v600
  %v717 = vadd.f32 %v289, %v601
  %v718 = vadd.f32 %v290, %v602
  %v719 = vadd.f32 %v291, %v603
  %v720 = vadd.f32 %v292, %v604
  %v721 = vadd.f32 %v293, %v605
  %v722 = vadd.f32 %v294, %v606
  %v723 = vadd.f32 %v295, %v607
  %v724 = vadd.f32 %v296, %v608
  %v725 = vadd.f32 %v297, %v609
  %v726 = vadd.f32 %v298, %v610
  %v727 = vadd.f32 %v299, %v611
  %v728 = vadd.f32 %v300, %v612
  %v729 = vadd.f32 %v301, %v613
  %v730 = vadd.f32 %v302, %v614
  %v731 = vadd.f32 %v303, %v615
  %v732 = vadd.f32 %v304, %v616
  %v733 = vadd.f32 %v305, %v617
  %v734 = vadd.f32 %v306, %v618
  %v735 = vadd.f32 %v307, %v619
  %v736 = vadd.f32 %v308, %v620
  %v737 = vadd.f32 %v309, %v621
  %v738 = vadd.f32 %v310, %v622
  %v739 = vadd.f32 %v311, %v623
  %v740 = vadd.f32 %v312, %v624
  %v741 = vadd.f32 %v313, %v625
  %v742 = vadd.f32 %v314, %v626
  %v743 = vadd.f32 %v315, %v627
  %v744 = vadd.f32 %v316, %v628
  %v745 = vadd.f32 %v317, %v629
  %v746 = vadd.f32 %v318, %v630
  %v747 = vadd.f32 %v319, %v631
  %v748 = vadd.f32 %v320, %v632
  %v749 = vadd.f32 %v321, %v633
  %v750 = vadd.f32 %v322, %v634
  %v751 = vadd.f32 %v323, %v635
  %v752 = vadd.f32 %v324, %v636
  %v753 = vadd.f32 %v325, %v637
  %v754 = vadd.f32 %v326, %v638
  %v755 = vadd.f32 %v327, %v639
  %v756 = vadd.f32 %v328, %v640
  %v757 = vadd.f32 %v329, %v641
  %v758 = vadd.f32 %v330, %v642
  %v759 = vadd.f32 %v331, %v643
  %v760 = vadd.f32 %v332, %v644
  %v761 = vadd.f32 %v333, %v645
  %v762 = vadd.f32 %v334, %v646
  %v763 = vld [vmem:[%s4] sm:$0xf]
  %v765 = vlaneseq
  %v766 = vshrl.u32 %v765, 7
  %v767 = vsub.s32 0, %v766
  %v768 = vrot.slane %v763, %v767
  %v769 = vlaneseq
  %v770 = vshrl.u32 %v769, 7
  %v771 = vsub.s32 1, %v770
  %v772 = vrot.slane %v763, %v771
  %v773 = vlaneseq
  %v774 = vshrl.u32 %v773, 7
  %v775 = vsub.s32 2, %v774
  %v776 = vrot.slane %v763, %v775
  %v777 = vlaneseq
  %v778 = vshrl.u32 %v777, 7
  %v779 = vsub.s32 3, %v778
  %v780 = vrot.slane %v763, %v779
  %v785 = vadd.f32 %v647, %v768
  %v786 = vadd.f32 %v648, %v772
  %v787 = vadd.f32 %v649, %v776
  %v788 = vadd.f32 %v650, %v780
  %v789 = vadd.f32 %v651, %v768
  %v790 = vadd.f32 %v652, %v772
  %v791 = vadd.f32 %v653, %v776
  %v792 = vadd.f32 %v654, %v780
  %v793 = vadd.f32 %v655, %v768
  %v794 = vadd.f32 %v656, %v772
  %v795 = vadd.f32 %v657, %v776
  %v796 = vadd.f32 %v658, %v780
  %v797 = vadd.f32 %v659, %v768
  %v798 = vadd.f32 %v660, %v772
  %v799 = vadd.f32 %v661, %v776
  %v800 = vadd.f32 %v662, %v780
  %v801 = vadd.f32 %v663, %v768
  %v802 = vadd.f32 %v664, %v772
  %v803 = vadd.f32 %v665, %v776
  %v804 = vadd.f32 %v666, %v780
  %v805 = vadd.f32 %v667, %v768
  %v806 = vadd.f32 %v668, %v772
  %v807 = vadd.f32 %v669, %v776
  %v808 = vadd.f32 %v670, %v780
  %v809 = vadd.f32 %v671, %v768
  %v810 = vadd.f32 %v672, %v772
  %v811 = vadd.f32 %v673, %v776
  %v812 = vadd.f32 %v674, %v780
  %v813 = vadd.f32 %v675, %v768
  %v814 = vadd.f32 %v676, %v772
  %v815 = vadd.f32 %v677, %v776
  %v816 = vadd.f32 %v678, %v780
  %v817 = vadd.f32 %v679, %v768
  %v818 = vadd.f32 %v680, %v772
  %v819 = vadd.f32 %v681, %v776
  %v820 = vadd.f32 %v682, %v780
  %v821 = vadd.f32 %v683, %v768
  %v822 = vadd.f32 %v684, %v772
  %v823 = vadd.f32 %v685, %v776
  %v824 = vadd.f32 %v686, %v780
  %v825 = vadd.f32 %v687, %v768
  %v826 = vadd.f32 %v688, %v772
  %v827 = vadd.f32 %v689, %v776
  %v828 = vadd.f32 %v690, %v780
  %v829 = vadd.f32 %v691, %v768
  %v830 = vadd.f32 %v692, %v772
  %v831 = vadd.f32 %v693, %v776
  %v832 = vadd.f32 %v694, %v780
  %v833 = vadd.f32 %v695, %v768
  %v834 = vadd.f32 %v696, %v772
  %v835 = vadd.f32 %v697, %v776
  %v836 = vadd.f32 %v698, %v780
  %v837 = vadd.f32 %v699, %v768
  %v838 = vadd.f32 %v700, %v772
  %v839 = vadd.f32 %v701, %v776
  %v840 = vadd.f32 %v702, %v780
  %v841 = vadd.f32 %v703, %v768
  %v842 = vadd.f32 %v704, %v772
  %v843 = vadd.f32 %v705, %v776
  %v844 = vadd.f32 %v706, %v780
  %v845 = vadd.f32 %v707, %v768
  %v846 = vadd.f32 %v708, %v772
  %v847 = vadd.f32 %v709, %v776
  %v848 = vadd.f32 %v710, %v780
  %v849 = vadd.f32 %v711, %v768
  %v850 = vadd.f32 %v712, %v772
  %v851 = vadd.f32 %v713, %v776
  %v852 = vadd.f32 %v714, %v780
  %v853 = vadd.f32 %v715, %v768
  %v854 = vadd.f32 %v716, %v772
  %v855 = vadd.f32 %v717, %v776
  %v856 = vadd.f32 %v718, %v780
  %v857 = vadd.f32 %v719, %v768
  %v858 = vadd.f32 %v720, %v772
  %v859 = vadd.f32 %v721, %v776
  %v860 = vadd.f32 %v722, %v780
  %v861 = vadd.f32 %v723, %v768
  %v862 = vadd.f32 %v724, %v772
  %v863 = vadd.f32 %v725, %v776
  %v864 = vadd.f32 %v726, %v780
  %v865 = vadd.f32 %v727, %v768
  %v866 = vadd.f32 %v728, %v772
  %v867 = vadd.f32 %v729, %v776
  %v868 = vadd.f32 %v730, %v780
  %v869 = vadd.f32 %v731, %v768
  %v870 = vadd.f32 %v732, %v772
  %v871 = vadd.f32 %v733, %v776
  %v872 = vadd.f32 %v734, %v780
  %v873 = vadd.f32 %v735, %v768
  %v874 = vadd.f32 %v736, %v772
  %v875 = vadd.f32 %v737, %v776
  %v876 = vadd.f32 %v738, %v780
  %v877 = vadd.f32 %v739, %v768
  %v878 = vadd.f32 %v740, %v772
  %v879 = vadd.f32 %v741, %v776
  %v880 = vadd.f32 %v742, %v780
  %v881 = vadd.f32 %v743, %v768
  %v882 = vadd.f32 %v744, %v772
  %v883 = vadd.f32 %v745, %v776
  %v884 = vadd.f32 %v746, %v780
  %v885 = vadd.f32 %v747, %v768
  %v886 = vadd.f32 %v748, %v772
  %v887 = vadd.f32 %v749, %v776
  %v888 = vadd.f32 %v750, %v780
  %v889 = vadd.f32 %v751, %v768
  %v890 = vadd.f32 %v752, %v772
  %v891 = vadd.f32 %v753, %v776
  %v892 = vadd.f32 %v754, %v780
  %v893 = vadd.f32 %v755, %v768
  %v894 = vadd.f32 %v756, %v772
  %v895 = vadd.f32 %v757, %v776
  %v896 = vadd.f32 %v758, %v780
  %v897 = vadd.f32 %v759, %v768
  %v898 = vadd.f32 %v760, %v772
  %v899 = vadd.f32 %v761, %v776
  %v900 = vadd.f32 %v762, %v780
  %v901 = vmax.f32 %v785, 0.0
  %v902 = vmax.f32 %v786, 0.0
  %v903 = vmax.f32 %v787, 0.0
  %v904 = vmax.f32 %v788, 0.0
  %v905 = vmax.f32 %v789, 0.0
  %v906 = vmax.f32 %v790, 0.0
  %v907 = vmax.f32 %v791, 0.0
  %v908 = vmax.f32 %v792, 0.0
  %v909 = vmax.f32 %v793, 0.0
  %v910 = vmax.f32 %v794, 0.0
  %v911 = vmax.f32 %v795, 0.0
  %v912 = vmax.f32 %v796, 0.0
  %v913 = vmax.f32 %v797, 0.0
  %v914 = vmax.f32 %v798, 0.0
  %v915 = vmax.f32 %v799, 0.0
  %v916 = vmax.f32 %v800, 0.0
  %v917 = vmax.f32 %v801, 0.0
  %v918 = vmax.f32 %v802, 0.0
  %v919 = vmax.f32 %v803, 0.0
  %v920 = vmax.f32 %v804, 0.0
  %v921 = vmax.f32 %v805, 0.0
  %v922 = vmax.f32 %v806, 0.0
  %v923 = vmax.f32 %v807, 0.0
  %v924 = vmax.f32 %v808, 0.0
  %v925 = vmax.f32 %v809, 0.0
  %v926 = vmax.f32 %v810, 0.0
  %v927 = vmax.f32 %v811, 0.0
  %v928 = vmax.f32 %v812, 0.0
  %v929 = vmax.f32 %v813, 0.0
  %v930 = vmax.f32 %v814, 0.0
  %v931 = vmax.f32 %v815, 0.0
  %v932 = vmax.f32 %v816, 0.0
  %v933 = vmax.f32 %v817, 0.0
  %v934 = vmax.f32 %v818, 0.0
  %v935 = vmax.f32 %v819, 0.0
  %v936 = vmax.f32 %v820, 0.0
  %v937 = vmax.f32 %v821, 0.0
  %v938 = vmax.f32 %v822, 0.0
  %v939 = vmax.f32 %v823, 0.0
  %v940 = vmax.f32 %v824, 0.0
  %v941 = vmax.f32 %v825, 0.0
  %v942 = vmax.f32 %v826, 0.0
  %v943 = vmax.f32 %v827, 0.0
  %v944 = vmax.f32 %v828, 0.0
  %v945 = vmax.f32 %v829, 0.0
  %v946 = vmax.f32 %v830, 0.0
  %v947 = vmax.f32 %v831, 0.0
  %v948 = vmax.f32 %v832, 0.0
  %v949 = vmax.f32 %v833, 0.0
  %v950 = vmax.f32 %v834, 0.0
  %v951 = vmax.f32 %v835, 0.0
  %v952 = vmax.f32 %v836, 0.0
  %v953 = vmax.f32 %v837, 0.0
  %v954 = vmax.f32 %v838, 0.0
  %v955 = vmax.f32 %v839, 0.0
  %v956 = vmax.f32 %v840, 0.0
  %v957 = vmax.f32 %v841, 0.0
  %v958 = vmax.f32 %v842, 0.0
  %v959 = vmax.f32 %v843, 0.0
  %v960 = vmax.f32 %v844, 0.0
  %v961 = vmax.f32 %v845, 0.0
  %v962 = vmax.f32 %v846, 0.0
  %v963 = vmax.f32 %v847, 0.0
  %v964 = vmax.f32 %v848, 0.0
  %v965 = vmax.f32 %v849, 0.0
  %v966 = vmax.f32 %v850, 0.0
  %v967 = vmax.f32 %v851, 0.0
  %v968 = vmax.f32 %v852, 0.0
  %v969 = vmax.f32 %v853, 0.0
  %v970 = vmax.f32 %v854, 0.0
  %v971 = vmax.f32 %v855, 0.0
  %v972 = vmax.f32 %v856, 0.0
  %v973 = vmax.f32 %v857, 0.0
  %v974 = vmax.f32 %v858, 0.0
  %v975 = vmax.f32 %v859, 0.0
  %v976 = vmax.f32 %v860, 0.0
  %v977 = vmax.f32 %v861, 0.0
  %v978 = vmax.f32 %v862, 0.0
  %v979 = vmax.f32 %v863, 0.0
  %v980 = vmax.f32 %v864, 0.0
  %v981 = vmax.f32 %v865, 0.0
  %v982 = vmax.f32 %v866, 0.0
  %v983 = vmax.f32 %v867, 0.0
  %v984 = vmax.f32 %v868, 0.0
  %v985 = vmax.f32 %v869, 0.0
  %v986 = vmax.f32 %v870, 0.0
  %v987 = vmax.f32 %v871, 0.0
  %v988 = vmax.f32 %v872, 0.0
  %v989 = vmax.f32 %v873, 0.0
  %v990 = vmax.f32 %v874, 0.0
  %v991 = vmax.f32 %v875, 0.0
  %v992 = vmax.f32 %v876, 0.0
  %v993 = vmax.f32 %v877, 0.0
  %v994 = vmax.f32 %v878, 0.0
  %v995 = vmax.f32 %v879, 0.0
  %v996 = vmax.f32 %v880, 0.0
  %v997 = vmax.f32 %v881, 0.0
  %v998 = vmax.f32 %v882, 0.0
  %v999 = vmax.f32 %v883, 0.0
  %v1000 = vmax.f32 %v884, 0.0
  %v1001 = vmax.f32 %v885, 0.0
  %v1002 = vmax.f32 %v886, 0.0
  %v1003 = vmax.f32 %v887, 0.0
  %v1004 = vmax.f32 %v888, 0.0
  %v1005 = vmax.f32 %v889, 0.0
  %v1006 = vmax.f32 %v890, 0.0
  %v1007 = vmax.f32 %v891, 0.0
  %v1008 = vmax.f32 %v892, 0.0
  %v1009 = vmax.f32 %v893, 0.0
  %v1010 = vmax.f32 %v894, 0.0
  %v1011 = vmax.f32 %v895, 0.0
  %v1012 = vmax.f32 %v896, 0.0
  %v1013 = vmax.f32 %v897, 0.0
  %v1014 = vmax.f32 %v898, 0.0
  %v1015 = vmax.f32 %v899, 0.0
  %v1016 = vmax.f32 %v900, 0.0
  %v1017 = vld [vmem:[%s5] sm:$0xff]
  %v1018 = vld [vmem:[%s5 + $0x8] sm:$0xff]
  %v1019 = vld [vmem:[%s5 + $0x10] sm:$0xff]
  %v1020 = vld [vmem:[%s5 + $0x18] sm:$0xff]
  %v1021 = vld [vmem:[%s5 + $0x20] sm:$0xff]
  %v1022 = vld [vmem:[%s5 + $0x28] sm:$0xff]
  %v1023 = vld [vmem:[%s5 + $0x30] sm:$0xff]
  %v1024 = vld [vmem:[%s5 + $0x38] sm:$0xff]
  %v1025 = vld [vmem:[%s5 + $0x40] sm:$0xff]
  %v1026 = vld [vmem:[%s5 + $0x48] sm:$0xff]
  %v1027 = vld [vmem:[%s5 + $0x50] sm:$0xff]
  %v1028 = vld [vmem:[%s5 + $0x58] sm:$0xff]
  %v1029 = vld [vmem:[%s5 + $0x60] sm:$0xff]
  %v1030 = vld [vmem:[%s5 + $0x68] sm:$0xff]
  %v1031 = vld [vmem:[%s5 + $0x70] sm:$0xff]
  %v1032 = vld [vmem:[%s5 + $0x78] sm:$0xff]
  %v1033 = vld [vmem:[%s5 + $0x80] sm:$0xff]
  %v1034 = vld [vmem:[%s5 + $0x88] sm:$0xff]
  %v1035 = vld [vmem:[%s5 + $0x90] sm:$0xff]
  %v1036 = vld [vmem:[%s5 + $0x98] sm:$0xff]
  %v1037 = vld [vmem:[%s5 + $0xa0] sm:$0xff]
  %v1038 = vld [vmem:[%s5 + $0xa8] sm:$0xff]
  %v1039 = vld [vmem:[%s5 + $0xb0] sm:$0xff]
  %v1040 = vld [vmem:[%s5 + $0xb8] sm:$0xff]
  %v1041 = vld [vmem:[%s5 + $0xc0] sm:$0xff]
  %v1042 = vld [vmem:[%s5 + $0xc8] sm:$0xff]
  %v1043 = vld [vmem:[%s5 + $0xd0] sm:$0xff]
  %v1044 = vld [vmem:[%s5 + $0xd8] sm:$0xff]
  %v1045 = vld [vmem:[%s5 + $0xe0] sm:$0xff]
  %v1046 = vld [vmem:[%s5 + $0xe8] sm:$0xff]
  %v1047 = vld [vmem:[%s5 + $0xf0] sm:$0xff]
  %v1048 = vld [vmem:[%s5 + $0xf8] sm:$0xff]
  %v1049 = vld [vmem:[%s5 + $0x100] sm:$0xff]
  %v1050 = vld [vmem:[%s5 + $0x108] sm:$0xff]
  %v1051 = vld [vmem:[%s5 + $0x110] sm:$0xff]
  %v1052 = vld [vmem:[%s5 + $0x118] sm:$0xff]
  %v1053 = vld [vmem:[%s5 + $0x120] sm:$0xff]
  %v1054 = vld [vmem:[%s5 + $0x128] sm:$0xff]
  %v1055 = vld [vmem:[%s5 + $0x130] sm:$0xff]
  %v1056 = vld [vmem:[%s5 + $0x138] sm:$0xff]
  %v1057 = vld [vmem:[%s5 + $0x140] sm:$0xff]
  %v1058 = vld [vmem:[%s5 + $0x148] sm:$0xff]
  %v1059 = vld [vmem:[%s5 + $0x150] sm:$0xff]
  %v1060 = vld [vmem:[%s5 + $0x158] sm:$0xff]
  %v1061 = vld [vmem:[%s5 + $0x160] sm:$0xff]
  %v1062 = vld [vmem:[%s5 + $0x168] sm:$0xff]
  %v1063 = vld [vmem:[%s5 + $0x170] sm:$0xff]
  %v1064 = vld [vmem:[%s5 + $0x178] sm:$0xff]
  %v1065 = vld [vmem:[%s5 + $0x180] sm:$0xff]
  %v1066 = vld [vmem:[%s5 + $0x188] sm:$0xff]
  %v1067 = vld [vmem:[%s5 + $0x190] sm:$0xff]
  %v1068 = vld [vmem:[%s5 + $0x198] sm:$0xff]
  %v1069 = vld [vmem:[%s5 + $0x1a0] sm:$0xff]
  %v1070 = vld [vmem:[%s5 + $0x1a8] sm:$0xff]
  %v1071 = vld [vmem:[%s5 + $0x1b0] sm:$0xff]
  %v1072 = vld [vmem:[%s5 + $0x1b8] sm:$0xff]
  %v1073 = vld [vmem:[%s5 + $0x1c0] sm:$0xff]
  %v1074 = vld [vmem:[%s5 + $0x1c8] sm:$0xff]
  %v1075 = vld [vmem:[%s5 + $0x1d0] sm:$0xff]
  %v1076 = vld [vmem:[%s5 + $0x1d8] sm:$0xff]
  %v1077 = vld [vmem:[%s5 + $0x1e0] sm:$0xff]
  %v1078 = vld [vmem:[%s5 + $0x1e8] sm:$0xff]
  %v1079 = vld [vmem:[%s5 + $0x1f0] sm:$0xff]
  %v1080 = vld [vmem:[%s5 + $0x1f8] sm:$0xff]
  %1081 = vmatprep.subr.mxu0 0.0
  %1082 = vmatpush1.msra.mxu0 %v1017
  %1083 = vmatprep.subr.mxu0 0.0
  %1084 = vmatpush1.msra.mxu0 %v1018
  %1085 = vmatprep.subr.mxu0 0.0
  %1086 = vmatpush1.msra.mxu0 %v1019
  %1087 = vmatprep.subr.mxu0 0.0
  %1088 = vmatpush1.msra.mxu0 %v1020
  %1089 = vmatprep.subr.mxu0 0.0
  %1090 = vmatpush1.msra.mxu0 %v1021
  %1091 = vmatprep.subr.mxu0 0.0
  %1092 = vmatpush1.msra.mxu0 %v1022
  %1093 = vmatprep.subr.mxu0 0.0
  %1094 = vmatpush1.msra.mxu0 %v1023
  %1095 = vmatprep.subr.mxu0 0.0
  %1096 = vmatpush1.msra.mxu0 %v1024
  %1097 = vmatprep.subr.mxu0 0.0
  %1098 = vmatpush1.msra.mxu0 %v1025
  %1099 = vmatprep.subr.mxu0 0.0
  %1100 = vmatpush1.msra.mxu0 %v1026
  %1101 = vmatprep.subr.mxu0 0.0
  %1102 = vmatpush1.msra.mxu0 %v1027
  %1103 = vmatprep.subr.mxu0 0.0
  %1104 = vmatpush1.msra.mxu0 %v1028
  %1105 = vmatprep.subr.mxu0 0.0
  %1106 = vmatpush1.msra.mxu0 %v1029
  %1107 = vmatprep.subr.mxu0 0.0
  %1108 = vmatpush1.msra.mxu0 %v1030
  %1109 = vmatprep.subr.mxu0 0.0
  %1110 = vmatpush1.msra.mxu0 %v1031
  %1111 = vmatprep.subr.mxu0 0.0
  %1112 = vmatpush1.msra.mxu0 %v1032
  %1113 = vmatprep.subr.mxu0 0.0
  %1114 = vmatpush1.msra.mxu0 %v1033
  %1115 = vmatprep.subr.mxu0 0.0
  %1116 = vmatpush1.msra.mxu0 %v1034
  %1117 = vmatprep.subr.mxu0 0.0
  %1118 = vmatpush1.msra.mxu0 %v1035
  %1119 = vmatprep.subr.mxu0 0.0
  %1120 = vmatpush1.msra.mxu0 %v1036
  %1121 = vmatprep.subr.mxu0 0.0
  %1122 = vmatpush1.msra.mxu0 %v1037
  %1123 = vmatprep.subr.mxu0 0.0
  %1124 = vmatpush1.msra.mxu0 %v1038
  %1125 = vmatprep.subr.mxu0 0.0
  %1126 = vmatpush1.msra.mxu0 %v1039
  %1127 = vmatprep.subr.mxu0 0.0
  %1128 = vmatpush1.msra.mxu0 %v1040
  %1129 = vmatprep.subr.mxu0 0.0
  %1130 = vmatpush1.msra.mxu0 %v1041
  %1131 = vmatprep.subr.mxu0 0.0
  %1132 = vmatpush1.msra.mxu0 %v1042
  %1133 = vmatprep.subr.mxu0 0.0
  %1134 = vmatpush1.msra.mxu0 %v1043
  %1135 = vmatprep.subr.mxu0 0.0
  %1136 = vmatpush1.msra.mxu0 %v1044
  %1137 = vmatprep.subr.mxu0 0.0
  %1138 = vmatpush1.msra.mxu0 %v1045
  %1139 = vmatprep.subr.mxu0 0.0
  %1140 = vmatpush1.msra.mxu0 %v1046
  %1141 = vmatprep.subr.mxu0 0.0
  %1142 = vmatpush1.msra.mxu0 %v1047
  %1143 = vmatprep.subr.mxu0 0.0
  %1144 = vmatpush1.msra.mxu0 %v1048
  %1145 = vmatprep.mubr.f32.mxu0 %v902
  %1146 = vmatmul.mubr.f32.gmra.mrb[0].mxu0 %v901
  %v1147 = vpop.f32.mrb[0].mxu0
  %v1148 = vadd.f32 0.0, %v1147
  %v1149 = vpop.f32.mrb[0].mxu0
  %1150 = vmatprep.mubr.f32.mxu0 %v906
  %1151 = vmatmul.mubr.f32.gmra.mrb[0].mxu0 %v905
  %v1152 = vpop.f32.mrb[0].mxu0
  %v1153 = vadd.f32 0.0, %v1152
  %v1154 = vpop.f32.mrb[0].mxu0
  %1155 = vmatprep.mubr.f32.mxu0 %v910
  %1156 = vmatmul.mubr.f32.gmra.mrb[0].mxu0 %v909
  %v1157 = vpop.f32.mrb[0].mxu0
  %v1158 = vadd.f32 0.0, %v1157
  %v1159 = vpop.f32.mrb[0].mxu0
  %1160 = vmatprep.mubr.f32.mxu0 %v914
  %1161 = vmatmul.mubr.f32.gmra.mrb[0].mxu0 %v913
  %v1162 = vpop.f32.mrb[0].mxu0
  %v1163 = vadd.f32 0.0, %v1162
  %v1164 = vpop.f32.mrb[0].mxu0
  %1165 = vmatprep.mubr.f32.mxu0 %v918
  %1166 = vmatmul.mubr.f32.gmra.mrb[0].mxu0 %v917
  %v1167 = vpop.f32.mrb[0].mxu0
  %v1168 = vadd.f32 0.0, %v1167
  %v1169 = vpop.f32.mrb[0].mxu0
  %1170 = vmatprep.mubr.f32.mxu0 %v922
  %1171 = vmatmul.mubr.f32.gmra.mrb[0].mxu0 %v921
  %v1172 = vpop.f32.mrb[0].mxu0
  %v1173 = vadd.f32 0.0, %v1172
  %v1174 = vpop.f32.mrb[0].mxu0
  %1175 = vmatprep.mubr.f32.mxu0 %v926
  %1176 = vmatmul.mubr.f32.gmra.mrb[0].mxu0 %v925
  %v1177 = vpop.f32.mrb[0].mxu0
  %v1178 = vadd.f32 0.0, %v1177
  %v1179 = vpop.f32.mrb[0].mxu0
  %1180 = vmatprep.mubr.f32.mxu0 %v930
  %1181 = vmatmul.mubr.f32.gmra.mrb[0].mxu0 %v929
  %v1182 = vpop.f32.mrb[0].mxu0
  %v1183 = vadd.f32 0.0, %v1182
  %v1184 = vpop.f32.mrb[0].mxu0
  %1185 = vmatprep.mubr.f32.mxu0 %v934
  %1186 = vmatmul.mubr.f32.gmra.mrb[0].mxu0 %v933
  %v1187 = vpop.f32.mrb[0].mxu0
  %v1188 = vadd.f32 0.0, %v1187
  %v1189 = vpop.f32.mrb[0].mxu0
  %1190 = vmatprep.mubr.f32.mxu0 %v938
  %1191 = vmatmul.mubr.f32.gmra.mrb[0].mxu0 %v937
  %v1192 = vpop.f32.mrb[0].mxu0
  %v1193 = vadd.f32 0.0, %v1192
  %v1194 = vpop.f32.mrb[0].mxu0
  %1195 = vmatprep.mubr.f32.mxu0 %v942
  %1196 = vmatmul.mubr.f32.gmra.mrb[0].mxu0 %v941
  %v1197 = vpop.f32.mrb[0].mxu0
  %v1198 = vadd.f32 0.0, %v1197
  %v1199 = vpop.f32.mrb[0].mxu0
  %1200 = vmatprep.mubr.f32.mxu0 %v946
  %1201 = vmatmul.mubr.f32.gmra.mrb[0].mxu0 %v945
  %v1202 = vpop.f32.mrb[0].mxu0
  %v1203 = vadd.f32 0.0, %v1202
  %v1204 = vpop.f32.mrb[0].mxu0
  %1205 = vmatprep.mubr.f32.mxu0 %v950
  %1206 = vmatmul.mubr.f32.gmra.mrb[0].mxu0 %v949
  %v1207 = vpop.f32.mrb[0].mxu0
  %v1208 = vadd.f32 0.0, %v1207
  %v1209 = vpop.f32.mrb[0].mxu0
  %1210 = vmatprep.mubr.f32.mxu0 %v954
  %1211 = vmatmul.mubr.f32.gmra.mrb[0].mxu0 %v953
  %v1212 = vpop.f32.mrb[0].mxu0
  %v1213 = vadd.f32 0.0, %v1212
  %v1214 = vpop.f32.mrb[0].mxu0
  %1215 = vmatprep.mubr.f32.mxu0 %v958
  %1216 = vmatmul.mubr.f32.gmra.mrb[0].mxu0 %v957
  %v1217 = vpop.f32.mrb[0].mxu0
  %v1218 = vadd.f32 0.0, %v1217
  %v1219 = vpop.f32.mrb[0].mxu0
  %1220 = vmatprep.mubr.f32.mxu0 %v962
  %1221 = vmatmul.mubr.f32.gmra.mrb[0].mxu0 %v961
  %v1222 = vpop.f32.mrb[0].mxu0
  %v1223 = vadd.f32 0.0, %v1222
  %v1224 = vpop.f32.mrb[0].mxu0
  %1225 = vmatprep.mubr.f32.mxu0 %v966
  %1226 = vmatmul.mubr.f32.gmra.mrb[0].mxu0 %v965
  %v1227 = vpop.f32.mrb[0].mxu0
  %v1228 = vadd.f32 0.0, %v1227
  %v1229 = vpop.f32.mrb[0].mxu0
  %1230 = vmatprep.mubr.f32.mxu0 %v970
  %1231 = vmatmul.mubr.f32.gmra.mrb[0].mxu0 %v969
  %v1232 = vpop.f32.mrb[0].mxu0
  %v1233 = vadd.f32 0.0, %v1232
  %v1234 = vpop.f32.mrb[0].mxu0
  %1235 = vmatprep.mubr.f32.mxu0 %v974
  %1236 = vmatmul.mubr.f32.gmra.mrb[0].mxu0 %v973
  %v1237 = vpop.f32.mrb[0].mxu0
  %v1238 = vadd.f32 0.0, %v1237
  %v1239 = vpop.f32.mrb[0].mxu0
  %1240 = vmatprep.mubr.f32.mxu0 %v978
  %1241 = vmatmul.mubr.f32.gmra.mrb[0].mxu0 %v977
  %v1242 = vpop.f32.mrb[0].mxu0
  %v1243 = vadd.f32 0.0, %v1242
  %v1244 = vpop.f32.mrb[0].mxu0
  %1245 = vmatprep.mubr.f32.mxu0 %v982
  %1246 = vmatmul.mubr.f32.gmra.mrb[0].mxu0 %v981
  %v1247 = vpop.f32.mrb[0].mxu0
  %v1248 = vadd.f32 0.0, %v1247
  %v1249 = vpop.f32.mrb[0].mxu0
  %1250 = vmatprep.mubr.f32.mxu0 %v986
  %1251 = vmatmul.mubr.f32.gmra.mrb[0].mxu0 %v985
  %v1252 = vpop.f32.mrb[0].mxu0
  %v1253 = vadd.f32 0.0, %v1252
  %v1254 = vpop.f32.mrb[0].mxu0
  %1255 = vmatprep.mubr.f32.mxu0 %v990
  %1256 = vmatmul.mubr.f32.gmra.mrb[0].mxu0 %v989
  %v1257 = vpop.f32.mrb[0].mxu0
  %v1258 = vadd.f32 0.0, %v1257
  %v1259 = vpop.f32.mrb[0].mxu0
  %1260 = vmatprep.mubr.f32.mxu0 %v994
  %1261 = vmatmul.mubr.f32.gmra.mrb[0].mxu0 %v993
  %v1262 = vpop.f32.mrb[0].mxu0
  %v1263 = vadd.f32 0.0, %v1262
  %v1264 = vpop.f32.mrb[0].mxu0
  %1265 = vmatprep.mubr.f32.mxu0 %v998
  %1266 = vmatmul.mubr.f32.gmra.mrb[0].mxu0 %v997
  %v1267 = vpop.f32.mrb[0].mxu0
  %v1268 = vadd.f32 0.0, %v1267
  %v1269 = vpop.f32.mrb[0].mxu0
  %1270 = vmatprep.mubr.f32.mxu0 %v1002
  %1271 = vmatmul.mubr.f32.gmra.mrb[0].mxu0 %v1001
  %v1272 = vpop.f32.mrb[0].mxu0
  %v1273 = vadd.f32 0.0, %v1272
  %v1274 = vpop.f32.mrb[0].mxu0
  %1275 = vmatprep.mubr.f32.mxu0 %v1006
  %1276 = vmatmul.mubr.f32.gmra.mrb[0].mxu0 %v1005
  %v1277 = vpop.f32.mrb[0].mxu0
  %v1278 = vadd.f32 0.0, %v1277
  %v1279 = vpop.f32.mrb[0].mxu0
  %1280 = vmatprep.mubr.f32.mxu0 %v1010
  %1281 = vmatmul.mubr.f32.gmra.mrb[0].mxu0 %v1009
  %v1282 = vpop.f32.mrb[0].mxu0
  %v1283 = vadd.f32 0.0, %v1282
  %v1284 = vpop.f32.mrb[0].mxu0
  %1285 = vmatprep.mubr.f32.mxu0 %v1014
  %1286 = vmatmul.mubr.f32.gmra.mrb[0].mxu0 %v1013
  %v1287 = vpop.f32.mrb[0].mxu0
  %v1288 = vadd.f32 0.0, %v1287
  %v1289 = vpop.f32.mrb[0].mxu0
  %1290 = vdwg.mxu0
  %1291 = vmatprep.subr.mxu0 0.0
  %1292 = vmatpush1.msra.mxu0 %v1049
  %1293 = vmatprep.subr.mxu0 0.0
  %1294 = vmatpush1.msra.mxu0 %v1050
  %1295 = vmatprep.subr.mxu0 0.0
  %1296 = vmatpush1.msra.mxu0 %v1051
  %1297 = vmatprep.subr.mxu0 0.0
  %1298 = vmatpush1.msra.mxu0 %v1052
  %1299 = vmatprep.subr.mxu0 0.0
  %1300 = vmatpush1.msra.mxu0 %v1053
  %1301 = vmatprep.subr.mxu0 0.0
  %1302 = vmatpush1.msra.mxu0 %v1054
  %1303 = vmatprep.subr.mxu0 0.0
  %1304 = vmatpush1.msra.mxu0 %v1055
  %1305 = vmatprep.subr.mxu0 0.0
  %1306 = vmatpush1.msra.mxu0 %v1056
  %1307 = vmatprep.subr.mxu0 0.0
  %1308 = vmatpush1.msra.mxu0 %v1057
  %1309 = vmatprep.subr.mxu0 0.0
  %1310 = vmatpush1.msra.mxu0 %v1058
  %1311 = vmatprep.subr.mxu0 0.0
  %1312 = vmatpush1.msra.mxu0 %v1059
  %1313 = vmatprep.subr.mxu0 0.0
  %1314 = vmatpush1.msra.mxu0 %v1060
  %1315 = vmatprep.subr.mxu0 0.0
  %1316 = vmatpush1.msra.mxu0 %v1061
  %1317 = vmatprep.subr.mxu0 0.0
  %1318 = vmatpush1.msra.mxu0 %v1062
  %1319 = vmatprep.subr.mxu0 0.0
  %1320 = vmatpush1.msra.mxu0 %v1063
  %1321 = vmatprep.subr.mxu0 0.0
  %1322 = vmatpush1.msra.mxu0 %v1064
  %1323 = vmatprep.subr.mxu0 0.0
  %1324 = vmatpush1.msra.mxu0 %v1065
  %1325 = vmatprep.subr.mxu0 0.0
  %1326 = vmatpush1.msra.mxu0 %v1066
  %1327 = vmatprep.subr.mxu0 0.0
  %1328 = vmatpush1.msra.mxu0 %v1067
  %1329 = vmatprep.subr.mxu0 0.0
  %1330 = vmatpush1.msra.mxu0 %v1068
  %1331 = vmatprep.subr.mxu0 0.0
  %1332 = vmatpush1.msra.mxu0 %v1069
  %1333 = vmatprep.subr.mxu0 0.0
  %1334 = vmatpush1.msra.mxu0 %v1070
  %1335 = vmatprep.subr.mxu0 0.0
  %1336 = vmatpush1.msra.mxu0 %v1071
  %1337 = vmatprep.subr.mxu0 0.0
  %1338 = vmatpush1.msra.mxu0 %v1072
  %1339 = vmatprep.subr.mxu0 0.0
  %1340 = vmatpush1.msra.mxu0 %v1073
  %1341 = vmatprep.subr.mxu0 0.0
  %1342 = vmatpush1.msra.mxu0 %v1074
  %1343 = vmatprep.subr.mxu0 0.0
  %1344 = vmatpush1.msra.mxu0 %v1075
  %1345 = vmatprep.subr.mxu0 0.0
  %1346 = vmatpush1.msra.mxu0 %v1076
  %1347 = vmatprep.subr.mxu0 0.0
  %1348 = vmatpush1.msra.mxu0 %v1077
  %1349 = vmatprep.subr.mxu0 0.0
  %1350 = vmatpush1.msra.mxu0 %v1078
  %1351 = vmatprep.subr.mxu0 0.0
  %1352 = vmatpush1.msra.mxu0 %v1079
  %1353 = vmatprep.subr.mxu0 0.0
  %1354 = vmatpush1.msra.mxu0 %v1080
  %1355 = vmatprep.mubr.f32.mxu0 %v904
  %1356 = vmatmul.mubr.f32.gmra.mrb[0].mxu0 %v903
  %v1357 = vpop.f32.mrb[0].mxu0
  %v1358 = vadd.f32 %v1148, %v1357
  %v1359 = vpop.f32.mrb[0].mxu0
  %1360 = vmatprep.mubr.f32.mxu0 %v908
  %1361 = vmatmul.mubr.f32.gmra.mrb[0].mxu0 %v907
  %v1362 = vpop.f32.mrb[0].mxu0
  %v1363 = vadd.f32 %v1153, %v1362
  %v1364 = vpop.f32.mrb[0].mxu0
  %1365 = vmatprep.mubr.f32.mxu0 %v912
  %1366 = vmatmul.mubr.f32.gmra.mrb[0].mxu0 %v911
  %v1367 = vpop.f32.mrb[0].mxu0
  %v1368 = vadd.f32 %v1158, %v1367
  %v1369 = vpop.f32.mrb[0].mxu0
  %1370 = vmatprep.mubr.f32.mxu0 %v916
  %1371 = vmatmul.mubr.f32.gmra.mrb[0].mxu0 %v915
  %v1372 = vpop.f32.mrb[0].mxu0
  %v1373 = vadd.f32 %v1163, %v1372
  %v1374 = vpop.f32.mrb[0].mxu0
  %1375 = vmatprep.mubr.f32.mxu0 %v920
  %1376 = vmatmul.mubr.f32.gmra.mrb[0].mxu0 %v919
  %v1377 = vpop.f32.mrb[0].mxu0
  %v1378 = vadd.f32 %v1168, %v1377
  %v1379 = vpop.f32.mrb[0].mxu0
  %1380 = vmatprep.mubr.f32.mxu0 %v924
  %1381 = vmatmul.mubr.f32.gmra.mrb[0].mxu0 %v923
  %v1382 = vpop.f32.mrb[0].mxu0
  %v1383 = vadd.f32 %v1173, %v1382
  %v1384 = vpop.f32.mrb[0].mxu0
  %1385 = vmatprep.mubr.f32.mxu0 %v928
  %1386 = vmatmul.mubr.f32.gmra.mrb[0].mxu0 %v927
  %v1387 = vpop.f32.mrb[0].mxu0
  %v1388 = vadd.f32 %v1178, %v1387
  %v1389 = vpop.f32.mrb[0].mxu0
  %1390 = vmatprep.mubr.f32.mxu0 %v932
  %1391 = vmatmul.mubr.f32.gmra.mrb[0].mxu0 %v931
  %v1392 = vpop.f32.mrb[0].mxu0
  %v1393 = vadd.f32 %v1183, %v1392
  %v1394 = vpop.f32.mrb[0].mxu0
  %1395 = vmatprep.mubr.f32.mxu0 %v936
  %1396 = vmatmul.mubr.f32.gmra.mrb[0].mxu0 %v935
  %v1397 = vpop.f32.mrb[0].mxu0
  %v1398 = vadd.f32 %v1188, %v1397
  %v1399 = vpop.f32.mrb[0].mxu0
  %1400 = vmatprep.mubr.f32.mxu0 %v940
  %1401 = vmatmul.mubr.f32.gmra.mrb[0].mxu0 %v939
  %v1402 = vpop.f32.mrb[0].mxu0
  %v1403 = vadd.f32 %v1193, %v1402
  %v1404 = vpop.f32.mrb[0].mxu0
  %1405 = vmatprep.mubr.f32.mxu0 %v944
  %1406 = vmatmul.mubr.f32.gmra.mrb[0].mxu0 %v943
  %v1407 = vpop.f32.mrb[0].mxu0
  %v1408 = vadd.f32 %v1198, %v1407
  %v1409 = vpop.f32.mrb[0].mxu0
  %1410 = vmatprep.mubr.f32.mxu0 %v948
  %1411 = vmatmul.mubr.f32.gmra.mrb[0].mxu0 %v947
  %v1412 = vpop.f32.mrb[0].mxu0
  %v1413 = vadd.f32 %v1203, %v1412
  %v1414 = vpop.f32.mrb[0].mxu0
  %1415 = vmatprep.mubr.f32.mxu0 %v952
  %1416 = vmatmul.mubr.f32.gmra.mrb[0].mxu0 %v951
  %v1417 = vpop.f32.mrb[0].mxu0
  %v1418 = vadd.f32 %v1208, %v1417
  %v1419 = vpop.f32.mrb[0].mxu0
  %1420 = vmatprep.mubr.f32.mxu0 %v956
  %1421 = vmatmul.mubr.f32.gmra.mrb[0].mxu0 %v955
  %v1422 = vpop.f32.mrb[0].mxu0
  %v1423 = vadd.f32 %v1213, %v1422
  %v1424 = vpop.f32.mrb[0].mxu0
  %1425 = vmatprep.mubr.f32.mxu0 %v960
  %1426 = vmatmul.mubr.f32.gmra.mrb[0].mxu0 %v959
  %v1427 = vpop.f32.mrb[0].mxu0
  %v1428 = vadd.f32 %v1218, %v1427
  %v1429 = vpop.f32.mrb[0].mxu0
  %1430 = vmatprep.mubr.f32.mxu0 %v964
  %1431 = vmatmul.mubr.f32.gmra.mrb[0].mxu0 %v963
  %v1432 = vpop.f32.mrb[0].mxu0
  %v1433 = vadd.f32 %v1223, %v1432
  %v1434 = vpop.f32.mrb[0].mxu0
  %1435 = vmatprep.mubr.f32.mxu0 %v968
  %1436 = vmatmul.mubr.f32.gmra.mrb[0].mxu0 %v967
  %v1437 = vpop.f32.mrb[0].mxu0
  %v1438 = vadd.f32 %v1228, %v1437
  %v1439 = vpop.f32.mrb[0].mxu0
  %1440 = vmatprep.mubr.f32.mxu0 %v972
  %1441 = vmatmul.mubr.f32.gmra.mrb[0].mxu0 %v971
  %v1442 = vpop.f32.mrb[0].mxu0
  %v1443 = vadd.f32 %v1233, %v1442
  %v1444 = vpop.f32.mrb[0].mxu0
  %1445 = vmatprep.mubr.f32.mxu0 %v976
  %1446 = vmatmul.mubr.f32.gmra.mrb[0].mxu0 %v975
  %v1447 = vpop.f32.mrb[0].mxu0
  %v1448 = vadd.f32 %v1238, %v1447
  %v1449 = vpop.f32.mrb[0].mxu0
  %1450 = vmatprep.mubr.f32.mxu0 %v980
  %1451 = vmatmul.mubr.f32.gmra.mrb[0].mxu0 %v979
  %v1452 = vpop.f32.mrb[0].mxu0
  %v1453 = vadd.f32 %v1243, %v1452
  %v1454 = vpop.f32.mrb[0].mxu0
  %1455 = vmatprep.mubr.f32.mxu0 %v984
  %1456 = vmatmul.mubr.f32.gmra.mrb[0].mxu0 %v983
  %v1457 = vpop.f32.mrb[0].mxu0
  %v1458 = vadd.f32 %v1248, %v1457
  %v1459 = vpop.f32.mrb[0].mxu0
  %1460 = vmatprep.mubr.f32.mxu0 %v988
  %1461 = vmatmul.mubr.f32.gmra.mrb[0].mxu0 %v987
  %v1462 = vpop.f32.mrb[0].mxu0
  %v1463 = vadd.f32 %v1253, %v1462
  %v1464 = vpop.f32.mrb[0].mxu0
  %1465 = vmatprep.mubr.f32.mxu0 %v992
  %1466 = vmatmul.mubr.f32.gmra.mrb[0].mxu0 %v991
  %v1467 = vpop.f32.mrb[0].mxu0
  %v1468 = vadd.f32 %v1258, %v1467
  %v1469 = vpop.f32.mrb[0].mxu0
  %1470 = vmatprep.mubr.f32.mxu0 %v996
  %1471 = vmatmul.mubr.f32.gmra.mrb[0].mxu0 %v995
  %v1472 = vpop.f32.mrb[0].mxu0
  %v1473 = vadd.f32 %v1263, %v1472
  %v1474 = vpop.f32.mrb[0].mxu0
  %1475 = vmatprep.mubr.f32.mxu0 %v1000
  %1476 = vmatmul.mubr.f32.gmra.mrb[0].mxu0 %v999
  %v1477 = vpop.f32.mrb[0].mxu0
  %v1478 = vadd.f32 %v1268, %v1477
  %v1479 = vpop.f32.mrb[0].mxu0
  %1480 = vmatprep.mubr.f32.mxu0 %v1004
  %1481 = vmatmul.mubr.f32.gmra.mrb[0].mxu0 %v1003
  %v1482 = vpop.f32.mrb[0].mxu0
  %v1483 = vadd.f32 %v1273, %v1482
  %v1484 = vpop.f32.mrb[0].mxu0
  %1485 = vmatprep.mubr.f32.mxu0 %v1008
  %1486 = vmatmul.mubr.f32.gmra.mrb[0].mxu0 %v1007
  %v1487 = vpop.f32.mrb[0].mxu0
  %v1488 = vadd.f32 %v1278, %v1487
  %v1489 = vpop.f32.mrb[0].mxu0
  %1490 = vmatprep.mubr.f32.mxu0 %v1012
  %1491 = vmatmul.mubr.f32.gmra.mrb[0].mxu0 %v1011
  %v1492 = vpop.f32.mrb[0].mxu0
  %v1493 = vadd.f32 %v1283, %v1492
  %v1494 = vpop.f32.mrb[0].mxu0
  %1495 = vmatprep.mubr.f32.mxu0 %v1016
  %1496 = vmatmul.mubr.f32.gmra.mrb[0].mxu0 %v1015
  %v1497 = vpop.f32.mrb[0].mxu0
  %v1498 = vadd.f32 %v1288, %v1497
  %v1499 = vpop.f32.mrb[0].mxu0
  %1500 = vdwg.mxu0
  %vm1501 = vcmask 15360
  %1502 = vst.msk [vmem:[%s6] sm:$0xff] %vm1501, %v1358
  %1503 = vst.msk [vmem:[%s6 + $0x8] sm:$0xff] %vm1501, %v1363
  %1504 = vst.msk [vmem:[%s6 + $0x10] sm:$0xff] %vm1501, %v1368
  %1505 = vst.msk [vmem:[%s6 + $0x18] sm:$0xff] %vm1501, %v1373
  %1506 = vst.msk [vmem:[%s6 + $0x20] sm:$0xff] %vm1501, %v1378
  %1507 = vst.msk [vmem:[%s6 + $0x28] sm:$0xff] %vm1501, %v1383
  %1508 = vst.msk [vmem:[%s6 + $0x30] sm:$0xff] %vm1501, %v1388
  %1509 = vst.msk [vmem:[%s6 + $0x38] sm:$0xff] %vm1501, %v1393
  %1510 = vst.msk [vmem:[%s6 + $0x40] sm:$0xff] %vm1501, %v1398
  %1511 = vst.msk [vmem:[%s6 + $0x48] sm:$0xff] %vm1501, %v1403
  %1512 = vst.msk [vmem:[%s6 + $0x50] sm:$0xff] %vm1501, %v1408
  %1513 = vst.msk [vmem:[%s6 + $0x58] sm:$0xff] %vm1501, %v1413
  %1514 = vst.msk [vmem:[%s6 + $0x60] sm:$0xff] %vm1501, %v1418
  %1515 = vst.msk [vmem:[%s6 + $0x68] sm:$0xff] %vm1501, %v1423
  %1516 = vst.msk [vmem:[%s6 + $0x70] sm:$0xff] %vm1501, %v1428
  %1517 = vst.msk [vmem:[%s6 + $0x78] sm:$0xff] %vm1501, %v1433
  %1518 = vst.msk [vmem:[%s6 + $0x80] sm:$0xff] %vm1501, %v1438
  %1519 = vst.msk [vmem:[%s6 + $0x88] sm:$0xff] %vm1501, %v1443
  %1520 = vst.msk [vmem:[%s6 + $0x90] sm:$0xff] %vm1501, %v1448
  %1521 = vst.msk [vmem:[%s6 + $0x98] sm:$0xff] %vm1501, %v1453
  %1522 = vst.msk [vmem:[%s6 + $0xa0] sm:$0xff] %vm1501, %v1458
  %1523 = vst.msk [vmem:[%s6 + $0xa8] sm:$0xff] %vm1501, %v1463
  %1524 = vst.msk [vmem:[%s6 + $0xb0] sm:$0xff] %vm1501, %v1468
  %1525 = vst.msk [vmem:[%s6 + $0xb8] sm:$0xff] %vm1501, %v1473
  %1526 = vst.msk [vmem:[%s6 + $0xc0] sm:$0xff] %vm1501, %v1478
  %1527 = vst.msk [vmem:[%s6 + $0xc8] sm:$0xff] %vm1501, %v1483
  %1528 = vst.msk [vmem:[%s6 + $0xd0] sm:$0xff] %vm1501, %v1488
  %1529 = vst.msk [vmem:[%s6 + $0xd8] sm:$0xff] %vm1501, %v1493
  %vm1530 = vcmask 8192
  %1531 = vst.msk [vmem:[%s6 + $0xe0] sm:$0x1] %vm1530, %v1498
  // Predicated region
  $region26: #{tpu_custom_call.1} parent=0 // pred_check
    _
  $region27: #{tpu_custom_call.1} parent=0 // pred_check_branch
    %1533 = sbr.rel (0) target = $region29
  $region28: #{tpu_custom_call.1} parent=0 // pred_region
    _
  $region29: #{tpu_custom_call.1} parent=0 // pred_fallthru
    _
  // Predicated region
  $region30: #{tpu_custom_call.1} parent=0 // pred_check
    _
  $region31: #{tpu_custom_call.1} parent=0 // pred_check_branch
    %1535 = sbr.rel (0) target = $region33
  $region32: #{tpu_custom_call.1} parent=0 // pred_region
    _
  $region33: #{tpu_custom_call.1} parent=0 // pred_fallthru
    _

</llo_original>
